<compile_context>
chip_gen: v6e
topology: v6e:2x2x1
jax: 0.10.0
libtpu: 0.0.40
codegen_flags: <defaults>
</compile_context>

<pallas_src>
import jax
import jax.numpy as jnp
from jax import lax
from jax.experimental import pallas as pl
from jax.experimental.pallas import tpu as pltpu

EPS = 1e-5


def _conv_stats_kernel(xp_ref, w_ref, y_ref, s_ref):
    """Pass 1: 3x3 conv (valid on the pre-padded tile) as a single im2col
    matmul, plus per-tile per-channel sum / sum-of-squares for BatchNorm.

    xp_ref: (bh+2, Wp, Cin)   input tile with 1-px halo, native dtype
    w_ref:  (9*Cin, Cout_p)   tap-major (dy*3+dx) weights, lane-padded
    y_ref:  (bh*W, Cout_p)    f32 conv output (stash for pass 2), lane-dense
    s_ref:  (2, Cout_p)       f32 [sum, sum_of_squares] of this tile
    """
    bh2, Wp, _cin = xp_ref.shape
    bh, W = bh2 - 2, Wp - 2

    xp = xp_ref[...]  # keep native dtype; MXU takes bf16/f32 directly

    # im2col slab: (bh*W, 9*Cin) — one K=9*Cin matmul instead of 9 tiny dots.
    taps = []
    for dy in range(3):
        for dx in range(3):
            taps.append(xp[dy:dy + bh, dx:dx + W, :].reshape(bh * W, -1))
    patches = jnp.concatenate(taps, axis=-1)

    y = jnp.dot(patches, w_ref[...], preferred_element_type=jnp.float32)
    y_ref[...] = y

    s = jnp.sum(y, axis=0, keepdims=True)
    ss = jnp.sum(y * y, axis=0, keepdims=True)
    s_ref[...] = jnp.concatenate([s, ss], axis=0)


def _bn_relu_kernel(y_ref, scale_ref, shift_ref, o_ref):
    """Pass 2: y * scale + shift, ReLU.  Everything lane-dense (Cout_p wide)."""
    o_ref[...] = jnp.maximum(
        y_ref[...] * scale_ref[...] + shift_ref[...], 0.0
    ).astype(o_ref.dtype)


def _pick_bh(H, W, cout_p):
    """Largest divisor of H whose f32 conv-output block stays under ~2 MiB."""
    budget = 2 * 1024 * 1024
    max_bh = max(1, budget // (W * cout_p * 4))
    bh = 1
    for d in range(1, H + 1):
        if H % d == 0 and d <= max_bh:
            bh = d
    return bh


@jax.jit
def process_de(x_nchw, w_conv, b_conv, gamma, beta):
    """x_nchw: (N, Cin, H, W); w_conv: (Cout, Cin, 3, 3); b/gamma/beta: (Cout,)."""
    del b_conv  # conv bias is exactly cancelled by BN's batch-mean subtraction
    N, Cin, H, W = x_nchw.shape
    Cout = w_conv.shape[0]
    Cout_p = ((Cout + 127) // 128) * 128      # lane-dense channel dimension
    Wp = W + 2

    bh = _pick_bh(H, W, Cout_p)               # output rows per tile
    T = H // bh

    # Glue (single fused XLA rewrite): NCHW -> NHWC, zero-pad spatial by 1,
    # and materialize per-tile halos so BlockSpec blocks stay non-overlapping.
    x_nhwc = jnp.transpose(x_nchw, (0, 2, 3, 1))
    x_pad = jnp.pad(x_nhwc, ((0, 0), (1, 1), (1, 1), (0, 0)))
    if T == 1:
        x_tiled = x_pad[:, None]                                   # (N,1,H+2,Wp,Cin)
    else:
        x_tiled = jnp.stack(
            [x_pad[:, t * bh:t * bh + bh + 2] for t in range(T)], axis=1)

    # (Cout, Cin, 3, 3) -> (9*Cin, Cout_p), tap index = dy*3+dx, lane-padded.
    w2 = jnp.transpose(w_conv, (2, 3, 1, 0)).reshape(9 * Cin, Cout)
    w2 = jnp.pad(w2, ((0, 0), (0, Cout_p - Cout)))

    cparams = pltpu.CompilerParams(
        dimension_semantics=("parallel", "parallel"),
        vmem_limit_bytes=32 * 1024 * 1024,     # tiles sized well under this on v5e/v6e/v7x
    )

    # ---- Pass 1: conv (im2col matmul) + per-tile BN partial sums ----
    y_stash, part = pl.pallas_call(
        _conv_stats_kernel,
        grid=(N, T),
        in_specs=[
            pl.BlockSpec((None, None, bh + 2, Wp, Cin),
                         lambda n, t: (n, t, 0, 0, 0)),
            pl.BlockSpec((9 * Cin, Cout_p), lambda n, t: (0, 0)),
        ],
        out_specs=(
            pl.BlockSpec((None, None, bh * W, Cout_p),
                         lambda n, t: (n, t, 0, 0)),
            pl.BlockSpec((None, None, 2, Cout_p),
                         lambda n, t: (n, t, 0, 0)),
        ),
        out_shape=(
            jax.ShapeDtypeStruct((N, T, bh * W, Cout_p), jnp.float32),
            jax.ShapeDtypeStruct((N, T, 2, Cout_p), jnp.float32),
        ),
        compiler_params=cparams,
    )(x_tiled, w2)

    # ---- Finalize BN statistics (tiny per-channel math) ----
    M = N * H * W
    sums = jnp.sum(part, axis=(0, 1))                    # (2, Cout_p)
    mean = sums[0] / M
    var = jnp.maximum(sums[1] / M - mean * mean, 0.0)    # biased batch variance
    inv = lax.rsqrt(var + EPS)
    gamma_p = jnp.pad(gamma.astype(jnp.float32), (0, Cout_p - Cout))
    beta_p = jnp.pad(beta.astype(jnp.float32), (0, Cout_p - Cout))
    scale = (gamma_p * inv).reshape(1, Cout_p)
    shift = (beta_p - mean * gamma_p * inv).reshape(1, Cout_p)

    # ---- Pass 2: normalize (single FMA) + ReLU, lane-dense store ----
    out_t = pl.pallas_call(
        _bn_relu_kernel,
        grid=(N, T),
        in_specs=[
            pl.BlockSpec((None, None, bh * W, Cout_p),
                         lambda n, t: (n, t, 0, 0)),
            pl.BlockSpec((1, Cout_p), lambda n, t: (0, 0)),
            pl.BlockSpec((1, Cout_p), lambda n, t: (0, 0)),
        ],
        out_specs=pl.BlockSpec((None, None, bh * W, Cout_p),
                               lambda n, t: (n, t, 0, 0)),
        out_shape=jax.ShapeDtypeStruct((N, T, bh * W, Cout_p), x_nchw.dtype),
        compiler_params=cparams,
    )(y_stash, scale, shift)

    # Back to PyTorch NCHW layout (drop lane padding first).
    out_nhwc = out_t.reshape(N, H, W, Cout_p)[..., :Cout]
    return jnp.transpose(out_nhwc, (0, 3, 1, 2))


def _reference(x_nchw, w_conv, b_conv, gamma, beta):
    """Pure-JAX reference (conv+bias -> training-mode BN -> ReLU)."""
    y = lax.conv_general_dilated(
        x_nchw.astype(jnp.float32),
        w_conv.astype(jnp.float32),
        window_strides=(1, 1),
        padding=((1, 1), (1, 1)),
        dimension_numbers=("NCHW", "OIHW", "NCHW"),
    ) + b_conv[None, :, None, None]
    mean = jnp.mean(y, axis=(0, 2, 3), keepdims=True)
    var = jnp.mean((y - mean) ** 2, axis=(0, 2, 3), keepdims=True)
    y = (y - mean) * lax.rsqrt(var + EPS)
    y = y * gamma[None, :, None, None] + beta[None, :, None, None]
    return jnp.maximum(y, 0.0)


if __name__ == "__main__":
    key = jax.random.PRNGKey(0)
    k_x, k_w, k_b = jax.random.split(key, 3)

    N, Cin, Cout, H, W = 2, 4, 8, 16, 16

    x = jax.random.normal(k_x, (N, Cin, H, W), dtype=jnp.float32)

    # Deterministic parameter init (synthetic, not a checkpoint).
    fan_in = Cin * 3 * 3
    bound = 1.0 / (fan_in ** 0.5)
    w_conv = jax.random.uniform(k_w, (Cout, Cin, 3, 3), jnp.float32, -bound, bound)
    b_conv = jax.random.uniform(k_b, (Cout,), jnp.float32, -bound, bound)
    gamma = jnp.ones((Cout,), jnp.float32)   # BatchNorm2d default weight
    beta = jnp.zeros((Cout,), jnp.float32)   # BatchNorm2d default bias

    out = process_de(x, w_conv, b_conv, gamma, beta)
    out = jax.block_until_ready(out)

    ref = _reference(x, w_conv, b_conv, gamma, beta)
    assert out.shape == (N, Cout, H, W), out.shape
    err = float(jnp.max(jnp.abs(out - ref)))
    assert err < 2e-4, err

    print("KERNEL_OK")
</pallas_src>

<mosaic_0001>
module attributes {stable_mosaic.version = 11 : i64} {
  func.func @_bn_relu_kernel(%arg0: i32, %arg1: i32, %arg2: memref<1x1x256x128xf32, #tpu.memory_space<vmem>>, %arg3: memref<1x128xf32, #tpu.memory_space<vmem>>, %arg4: memref<1x128xf32, #tpu.memory_space<vmem>>, %arg5: memref<1x1x256x128xf32, #tpu.memory_space<vmem>>) attributes {dimension_semantics = [#tpu.dimension_semantics<parallel>, #tpu.dimension_semantics<parallel>], iteration_bounds = array<i64: 2, 1>, scalar_prefetch = 0 : i64, scratch_operands = 0 : i64, tpu.core_type = #tpu.core_type<tc>, window_params = [{transform_indices = @transform_0, window_bounds = array<i64: 1, 1, 256, 128>}, {pipeline_mode = #tpu.pipeline_mode<synchronous>, transform_indices = @transform_1, window_bounds = array<i64: 1, 128>}, {pipeline_mode = #tpu.pipeline_mode<synchronous>, transform_indices = @transform_2, window_bounds = array<i64: 1, 128>}, {transform_indices = @transform_3, window_bounds = array<i64: 1, 1, 256, 128>}]} {
    %c0 = arith.constant 0 : index
    %c0_0 = arith.constant 0 : index
    %c0_1 = arith.constant 0 : index
    %c0_2 = arith.constant 0 : index
    %0 = vector.load %arg2[%c0, %c0_0, %c0_1, %c0_2] : memref<1x1x256x128xf32, #tpu.memory_space<vmem>>, vector<1x1x256x128xf32>
    %1 = vector.shape_cast %0 : vector<1x1x256x128xf32> to vector<256x128xf32>
    %c0_3 = arith.constant 0 : index
    %c0_4 = arith.constant 0 : index
    %2 = vector.load %arg3[%c0_3, %c0_4] : memref<1x128xf32, #tpu.memory_space<vmem>>, vector<1x128xf32>
    %3 = vector.broadcast %2 : vector<1x128xf32> to vector<256x128xf32>
    %4 = arith.mulf %1, %3 : vector<256x128xf32>
    %c0_5 = arith.constant 0 : index
    %c0_6 = arith.constant 0 : index
    %5 = vector.load %arg4[%c0_5, %c0_6] : memref<1x128xf32, #tpu.memory_space<vmem>>, vector<1x128xf32>
    %6 = vector.broadcast %5 : vector<1x128xf32> to vector<256x128xf32>
    %7 = arith.addf %4, %6 : vector<256x128xf32>
    %cst = arith.constant 0.000000e+00 : f32
    %8 = vector.broadcast %cst : f32 to vector<256x128xf32>
    %9 = arith.maximumf %7, %8 : vector<256x128xf32>
    %c0_7 = arith.constant 0 : index
    %c0_8 = arith.constant 0 : index
    %c0_9 = arith.constant 0 : index
    %c0_10 = arith.constant 0 : index
    %10 = vector.load %arg5[%c0_7, %c0_8, %c0_9, %c0_10] : memref<1x1x256x128xf32, #tpu.memory_space<vmem>>, vector<1x1x256x128xf32>
    %11 = vector.shape_cast %10 : vector<1x1x256x128xf32> to vector<256x128xf32>
    %12 = vector.shape_cast %9 : vector<256x128xf32> to vector<1x1x256x128xf32>
    tpu.vector_store %arg5[%c0_7, %c0_8, %c0_9, %c0_10], %12 {strides = array<i32>} : memref<1x1x256x128xf32, #tpu.memory_space<vmem>>, vector<1x1x256x128xf32>,
    return
  }
  func.func @transform_0(%arg0: i32, %arg1: i32) -> (i32, i32, i32, i32) {
    %c0_i32 = arith.constant 0 : i32
    %c0_i32_0 = arith.constant 0 : i32
    %c0_i32_1 = arith.constant 0 : i32
    return %arg0, %arg1, %c0_i32, %c0_i32_0 : i32, i32, i32, i32
  }
  func.func @transform_1(%arg0: i32, %arg1: i32) -> (i32, i32) {
    %c0_i32 = arith.constant 0 : i32
    %c0_i32_0 = arith.constant 0 : i32
    %c0_i32_1 = arith.constant 0 : i32
    return %c0_i32, %c0_i32_0 : i32, i32
  }
  func.func @transform_2(%arg0: i32, %arg1: i32) -> (i32, i32) {
    %c0_i32 = arith.constant 0 : i32
    %c0_i32_0 = arith.constant 0 : i32
    %c0_i32_1 = arith.constant 0 : i32
    return %c0_i32, %c0_i32_0 : i32, i32
  }
  func.func @transform_3(%arg0: i32, %arg1: i32) -> (i32, i32, i32, i32) {
    %c0_i32 = arith.constant 0 : i32
    %c0_i32_0 = arith.constant 0 : i32
    %c0_i32_1 = arith.constant 0 : i32
    return %arg0, %arg1, %c0_i32, %c0_i32_0 : i32, i32, i32, i32
  }
}

module attributes {stable_mosaic.version = 11 : i64} {
  func.func @_conv_stats_kernel(%arg0: i32, %arg1: i32, %arg2: memref<1x1x18x18x4xf32, #tpu.memory_space<vmem>>, %arg3: memref<36x128xf32, #tpu.memory_space<vmem>>, %arg4: memref<1x1x256x128xf32, #tpu.memory_space<vmem>>, %arg5: memref<1x1x2x128xf32, #tpu.memory_space<vmem>>) attributes {dimension_semantics = [#tpu.dimension_semantics<parallel>, #tpu.dimension_semantics<parallel>], iteration_bounds = array<i64: 2, 1>, scalar_prefetch = 0 : i64, scratch_operands = 0 : i64, tpu.core_type = #tpu.core_type<tc>, window_params = [{transform_indices = @transform_0, window_bounds = array<i64: 1, 1, 18, 18, 4>}, {pipeline_mode = #tpu.pipeline_mode<synchronous>, transform_indices = @transform_1, window_bounds = array<i64: 36, 128>}, {transform_indices = @transform_2, window_bounds = array<i64: 1, 1, 256, 128>}, {transform_indices = @transform_3, window_bounds = array<i64: 1, 1, 2, 128>}]} {
    %c0 = arith.constant 0 : index
    %c0_0 = arith.constant 0 : index
    %c0_1 = arith.constant 0 : index
    %c0_2 = arith.constant 0 : index
    %c0_3 = arith.constant 0 : index
    %0 = vector.load %arg2[%c0, %c0_0, %c0_1, %c0_2, %c0_3] : memref<1x1x18x18x4xf32, #tpu.memory_space<vmem>>, vector<1x1x18x18x4xf32>
    %1 = vector.shape_cast %0 : vector<1x1x18x18x4xf32> to vector<18x18x4xf32>
    %2 = vector.extract_strided_slice %1 {offsets = [0, 0, 0], sizes = [16, 16, 4], strides = [1, 1, 1]} : vector<18x18x4xf32> to vector<16x16x4xf32>
    %3 = vector.shape_cast %2 : vector<16x16x4xf32> to vector<256x4xf32>
    %4 = vector.extract_strided_slice %1 {offsets = [0, 1, 0], sizes = [16, 16, 4], strides = [1, 1, 1]} : vector<18x18x4xf32> to vector<16x16x4xf32>
    %5 = vector.shape_cast %4 : vector<16x16x4xf32> to vector<256x4xf32>
    %6 = vector.extract_strided_slice %1 {offsets = [0, 2, 0], sizes = [16, 16, 4], strides = [1, 1, 1]} : vector<18x18x4xf32> to vector<16x16x4xf32>
    %7 = vector.shape_cast %6 : vector<16x16x4xf32> to vector<256x4xf32>
    %8 = vector.extract_strided_slice %1 {offsets = [1, 0, 0], sizes = [16, 16, 4], strides = [1, 1, 1]} : vector<18x18x4xf32> to vector<16x16x4xf32>
    %9 = vector.shape_cast %8 : vector<16x16x4xf32> to vector<256x4xf32>
    %10 = vector.extract_strided_slice %1 {offsets = [1, 1, 0], sizes = [16, 16, 4], strides = [1, 1, 1]} : vector<18x18x4xf32> to vector<16x16x4xf32>
    %11 = vector.shape_cast %10 : vector<16x16x4xf32> to vector<256x4xf32>
    %12 = vector.extract_strided_slice %1 {offsets = [1, 2, 0], sizes = [16, 16, 4], strides = [1, 1, 1]} : vector<18x18x4xf32> to vector<16x16x4xf32>
    %13 = vector.shape_cast %12 : vector<16x16x4xf32> to vector<256x4xf32>
    %14 = vector.extract_strided_slice %1 {offsets = [2, 0, 0], sizes = [16, 16, 4], strides = [1, 1, 1]} : vector<18x18x4xf32> to vector<16x16x4xf32>
    %15 = vector.shape_cast %14 : vector<16x16x4xf32> to vector<256x4xf32>
    %16 = vector.extract_strided_slice %1 {offsets = [2, 1, 0], sizes = [16, 16, 4], strides = [1, 1, 1]} : vector<18x18x4xf32> to vector<16x16x4xf32>
    %17 = vector.shape_cast %16 : vector<16x16x4xf32> to vector<256x4xf32>
    %18 = vector.extract_strided_slice %1 {offsets = [2, 2, 0], sizes = [16, 16, 4], strides = [1, 1, 1]} : vector<18x18x4xf32> to vector<16x16x4xf32>
    %19 = vector.shape_cast %18 : vector<16x16x4xf32> to vector<256x4xf32>
    %20 = tpu.concatenate %3, %5, %7, %9, %11, %13, %15, %17, %19 in 1 : vector<256x4xf32>, vector<256x4xf32>, vector<256x4xf32>, vector<256x4xf32>, vector<256x4xf32>, vector<256x4xf32>, vector<256x4xf32>, vector<256x4xf32>, vector<256x4xf32> -> vector<256x36xf32>
    %c0_4 = arith.constant 0 : index
    %c0_5 = arith.constant 0 : index
    %21 = vector.load %arg3[%c0_4, %c0_5] : memref<36x128xf32, #tpu.memory_space<vmem>>, vector<36x128xf32>
    %cst = arith.constant dense<0.000000e+00> : vector<256x128xf32>
    %22 = tpu.matmul %20, %21, %cst {dimension_numbers = #tpu.dot_dimension_numbers<[1], [0], [0], [1], [0, 0, 1, 1], [], []>} : vector<256x36xf32>, vector<36x128xf32>, vector<256x128xf32> -> vector<256x128xf32>
    %c0_6 = arith.constant 0 : index
    %c0_7 = arith.constant 0 : index
    %c0_8 = arith.constant 0 : index
    %c0_9 = arith.constant 0 : index
    %23 = vector.load %arg4[%c0_6, %c0_7, %c0_8, %c0_9] : memref<1x1x256x128xf32, #tpu.memory_space<vmem>>, vector<1x1x256x128xf32>
    %24 = vector.shape_cast %23 : vector<1x1x256x128xf32> to vector<256x128xf32>
    %25 = vector.shape_cast %22 : vector<256x128xf32> to vector<1x1x256x128xf32>
    tpu.vector_store %arg4[%c0_6, %c0_7, %c0_8, %c0_9], %25 {strides = array<i32>} : memref<1x1x256x128xf32, #tpu.memory_space<vmem>>, vector<1x1x256x128xf32>,
    %cst_10 = arith.constant dense<0.000000e+00> : vector<128xf32>
    %26 = vector.multi_reduction <add>, %22, %cst_10 [0] : vector<256x128xf32> to vector<128xf32>
    %27 = vector.shape_cast %26 : vector<128xf32> to vector<1x128xf32>
    %28 = arith.mulf %22, %22 : vector<256x128xf32>
    %cst_11 = arith.constant dense<0.000000e+00> : vector<128xf32>
    %29 = vector.multi_reduction <add>, %28, %cst_11 [0] : vector<256x128xf32> to vector<128xf32>
    %30 = vector.shape_cast %29 : vector<128xf32> to vector<1x128xf32>
    %31 = tpu.concatenate %27, %30 in 0 : vector<1x128xf32>, vector<1x128xf32> -> vector<2x128xf32>
    %c0_12 = arith.constant 0 : index
    %c0_13 = arith.constant 0 : index
    %c0_14 = arith.constant 0 : index
    %c0_15 = arith.constant 0 : index
    %32 = vector.load %arg5[%c0_12, %c0_13, %c0_14, %c0_15] : memref<1x1x2x128xf32, #tpu.memory_space<vmem>>, vector<1x1x2x128xf32>
    %33 = vector.shape_cast %32 : vector<1x1x2x128xf32> to vector<2x128xf32>
    %34 = vector.shape_cast %31 : vector<2x128xf32> to vector<1x1x2x128xf32>
    tpu.vector_store %arg5[%c0_12, %c0_13, %c0_14, %c0_15], %34 {strides = array<i32>} : memref<1x1x2x128xf32, #tpu.memory_space<vmem>>, vector<1x1x2x128xf32>,
    return
  }
  func.func @transform_0(%arg0: i32, %arg1: i32) -> (i32, i32, i32, i32, i32) {
    %c0_i32 = arith.constant 0 : i32
    %c0_i32_0 = arith.constant 0 : i32
    %c0_i32_1 = arith.constant 0 : i32
    %c0_i32_2 = arith.constant 0 : i32
    return %arg0, %arg1, %c0_i32, %c0_i32_0, %c0_i32_1 : i32, i32, i32, i32, i32
  }
  func.func @transform_1(%arg0: i32, %arg1: i32) -> (i32, i32) {
    %c0_i32 = arith.constant 0 : i32
    %c0_i32_0 = arith.constant 0 : i32
    %c0_i32_1 = arith.constant 0 : i32
    return %c0_i32, %c0_i32_0 : i32, i32
  }
  func.func @transform_2(%arg0: i32, %arg1: i32) -> (i32, i32, i32, i32) {
    %c0_i32 = arith.constant 0 : i32
    %c0_i32_0 = arith.constant 0 : i32
    %c0_i32_1 = arith.constant 0 : i32
    return %arg0, %arg1, %c0_i32, %c0_i32_0 : i32, i32, i32, i32
  }
  func.func @transform_3(%arg0: i32, %arg1: i32) -> (i32, i32, i32, i32) {
    %c0_i32 = arith.constant 0 : i32
    %c0_i32_0 = arith.constant 0 : i32
    %c0_i32_1 = arith.constant 0 : i32
    return %arg0, %arg1, %c0_i32, %c0_i32_0 : i32, i32, i32, i32
  }
}

</mosaic_0001>

<llo_original>
// kernel: process_de.3
$region0: #{process_de.3}
  #allocation0 [shape = 'u32[]', space=smem, size = 0x4, offset = 0x4, fixed_abs, tag = 'smem constant byte address 0x4 - core index']
  #allocation1 [shape = 'u32[144,128]{1,0:T(1,128)}', space=vmem, size = 0x12000, scoped, tag = 'internal scratch']
  %s0 = inlined_call_operand.vmem [shape: f32[2,1,256,128], index: 0, kind: input, shape index: {}]
  %s1 = inlined_call_operand.vmem [shape: f32[1,128], index: 1, kind: input, shape index: {}]
  %s2 = inlined_call_operand.vmem [shape: f32[1,128], index: 2, kind: input, shape index: {}]
  %s3 = inlined_call_operand.vmem [shape: f32[2,1,256,128], index: 3, kind: output, shape index: {}]
  %s4 = sld [smem:[#allocation0]]
  $region45: #{process_de.3} parent=0
    _
  %s6 = ssub.s32 1, %s4
  %s7 = scalar_select 0, %s6, %s4
  loop: start=0, step=1, limit=4
  $region2: #{process_de.3} parent=0 // loop_pre_header
    _
  $region3: #{process_de.3} parent=0 // loop_header
    %s9 = sphi 0, %s13
    %p10 = scmp.ge.s32.totalorder %s9, 4
    %s16 = sphi 0, %s28
    %s17 = sphi 0, %s24
    %s18 = sphi 0, %s16
    %s19 = sphi 0, %s17
    %s20 = sphi 0, %s18
    %s21 = sphi 0, %s19
    %s33 = sphi 0, %s35
    %s36 = sphi 0, %s33
    %s37 = sphi 0, %s36
    %s53 = sphi 0, %s37
    %s57 = sphi 0, %s57
    %s59 = sphi 0, %s57
    %s60 = sphi 0, %s59
    %s74 = sphi 0, %s60
    %s78 = sphi 0, %s78
    %s80 = sphi 0, %s78
    %s81 = sphi 0, %s80
    %s95 = sphi 0, %s81
    %s103 = sphi 0, %s105
    %s106 = sphi 0, %s103
    %s107 = sphi 0, %s106
    %s123 = sphi 0, %s107
  $region4: #{process_de.3} parent=0 // loop_header_branch
    %12 = sbr.rel (%p10) target = $region8
  $region5: #{process_de.3} parent=0 // loop_body
    %s14 = ssub.s32 %s9, 1
    %s15 = ssub.s32 %s9, 2
    %s22 = sadd.s32 1, %s17
    %p23 = scmp.ge.s32.totalorder %s22, 1
    %s24 = scalar_select %p23, 0, %s22
    %s25 = sadd.s32 1, %s16
    %s26 = scalar_select %p23, %s25, %s16
    %p27 = scmp.ge.s32.totalorder %s26, 2
    %s28 = scalar_select %p27, 0, %s26
    %s29 = ssub.s32 %s16, %s28
    %s30 = ssub.s32 %s17, %s24
    %s31 = sor.u32 %s29, %s30
    %p32 = scmp.eq.s32.totalorder %s31, 0
    %s34 = sadd.s32 %s33, 1
    %s35 = scalar_select %p32, %s33, %s34
    %p38 = pneg %p32
    %p39 = scmp.eq.s32.totalorder %s9, 1
    %p40 = por %p38, %p39
    %p41 = scmp.ne.s32.totalorder %s33, %s36
    %p42 = scmp.eq.s32.totalorder %s9, 0
    %p43 = por %p41, %p42
    %p44 = scmp.ne.s32.totalorder %s33, %s36
    %p45 = scmp.eq.s32.totalorder %s14, 1
    %p46 = por %p44, %p45
    %p47 = scmp.ne.s32.totalorder %s36, %s37
    %p48 = scmp.eq.s32.totalorder %s14, 0
    %p49 = por %p47, %p48
    %p50 = scmp.ne.s32.totalorder %s36, %s37
    %p51 = scmp.eq.s32.totalorder %s15, 1
    %p52 = por %p50, %p51
    %p54 = scmp.ne.s32.totalorder %s37, %s53
    %p55 = scmp.eq.s32.totalorder %s15, 0
    %p56 = por %p54, %p55
    %s58 = sadd.s32 %s57, 1
    %p61 = scmp.eq.s32.totalorder %s9, 1
    %p62 = scmp.ne.s32.totalorder %s57, %s59
    %p63 = scmp.eq.s32.totalorder %s9, 0
    %p64 = por %p62, %p63
    %p65 = scmp.ne.s32.totalorder %s57, %s59
    %p66 = scmp.eq.s32.totalorder %s14, 1
    %p67 = por %p65, %p66
    %p68 = scmp.ne.s32.totalorder %s59, %s60
    %p69 = scmp.eq.s32.totalorder %s14, 0
    %p70 = por %p68, %p69
    %p71 = scmp.ne.s32.totalorder %s59, %s60
    %p72 = scmp.eq.s32.totalorder %s15, 1
    %p73 = por %p71, %p72
    %p75 = scmp.ne.s32.totalorder %s60, %s74
    %p76 = scmp.eq.s32.totalorder %s15, 0
    %p77 = por %p75, %p76
    %s79 = sadd.s32 %s78, 1
    %p82 = scmp.eq.s32.totalorder %s9, 1
    %p83 = scmp.ne.s32.totalorder %s78, %s80
    %p84 = scmp.eq.s32.totalorder %s9, 0
    %p85 = por %p83, %p84
    %p86 = scmp.ne.s32.totalorder %s78, %s80
    %p87 = scmp.eq.s32.totalorder %s14, 1
    %p88 = por %p86, %p87
    %p89 = scmp.ne.s32.totalorder %s80, %s81
    %p90 = scmp.eq.s32.totalorder %s14, 0
    %p91 = por %p89, %p90
    %p92 = scmp.ne.s32.totalorder %s80, %s81
    %p93 = scmp.eq.s32.totalorder %s15, 1
    %p94 = por %p92, %p93
    %p96 = scmp.ne.s32.totalorder %s81, %s95
    %p97 = scmp.eq.s32.totalorder %s15, 0
    %p98 = por %p96, %p97
    %s99 = ssub.s32 %s16, %s28
    %s100 = ssub.s32 %s17, %s24
    %s101 = sor.u32 %s99, %s100
    %p102 = scmp.eq.s32.totalorder %s101, 0
    %s104 = sadd.s32 %s103, 1
    %s105 = scalar_select %p102, %s103, %s104
    %p108 = pneg %p102
    %p109 = scmp.eq.s32.totalorder %s9, 1
    %p110 = por %p108, %p109
    %p111 = scmp.ne.s32.totalorder %s103, %s106
    %p112 = scmp.eq.s32.totalorder %s9, 0
    %p113 = por %p111, %p112
    %p114 = scmp.ne.s32.totalorder %s103, %s106
    %p115 = scmp.eq.s32.totalorder %s14, 1
    %p116 = por %p114, %p115
    %p117 = scmp.ne.s32.totalorder %s106, %s107
    %p118 = scmp.eq.s32.totalorder %s14, 0
    %p119 = por %p117, %p118
    %p120 = scmp.ne.s32.totalorder %s106, %s107
    %p121 = scmp.eq.s32.totalorder %s15, 1
    %p122 = por %p120, %p121
    %p124 = scmp.ne.s32.totalorder %s107, %s123
    %p125 = scmp.eq.s32.totalorder %s15, 0
    %p126 = por %p124, %p125
    %p127 = scmp.le.s32.totalorder 1, %s9
    %p128 = scmp.lt.s32.totalorder %s9, 3
    %p129 = pnand %p127, %p128
    %p130 = pneg %p129
    // Predicated region
    $region9: #{process_de.3} parent=5 // pred_check
      _
    $region10: #{process_de.3} parent=5 // pred_check_branch
      %132 = sbr.rel (%p129) target = $region12
    $region11: #{process_de.3} parent=5 // pred_region
      %s133 = ssub.s32 %s9, 1
      // Predicated region
      $region13: #{process_de.3} parent=11 // pred_check
        %p134 = pneg %p70
      $region14: #{process_de.3} parent=11 // pred_check_branch
        %136 = sbr.rel (%p134) target = $region16
      $region15: #{process_de.3} parent=11 // pred_region
        _
      $region16: #{process_de.3} parent=11 // pred_fallthru
        _
      // Predicated region
      $region17: #{process_de.3} parent=11 // pred_check
        %p137 = pneg %p91
      $region18: #{process_de.3} parent=11 // pred_check_branch
        %139 = sbr.rel (%p137) target = $region20
      $region19: #{process_de.3} parent=11 // pred_region
        _
      $region20: #{process_de.3} parent=11 // pred_fallthru
        _
    $region12: #{process_de.3} parent=5 // pred_fallthru
      _
    %p140 = scmp.lt.s32.totalorder %s9, 2
    // Predicated region
    $region21: #{process_de.3} parent=5 // pred_check
      %p141 = pneg %p140
    $region22: #{process_de.3} parent=5 // pred_check_branch
      %143 = sbr.rel (%p141) target = $region24
    $region23: #{process_de.3} parent=5 // pred_region
      // Predicated region
      $region25: #{process_de.3} parent=23 // pred_check
        %p144 = pneg %p43
      $region26: #{process_de.3} parent=23 // pred_check_branch
        %146 = sbr.rel (%p144) target = $region28
      $region27: #{process_de.3} parent=23 // pred_region
        %p147 = scmp.lt.s32.totalorder %s16, 1
        %s148 = scalar_select %p147, %s16, 1
        %p149 = scmp.lt.s32.totalorder %s17, 0
        %s150 = scalar_select %p149, %s17, 0
        %s151 = smul.addr %s150, 32
        %s152 = smul.addr %s148, 32
        %s153 = sadd.s32 %s151, %s152
        %s154 = smul.addr %s153, 8
        %s155 = scalar_lea.vmem %s0, %s154
      $region28: #{process_de.3} parent=23 // pred_fallthru
        _
    $region24: #{process_de.3} parent=5 // pred_fallthru
      _
    %p156 = scmp.le.s32.totalorder 1, %s9
    %p157 = scmp.lt.s32.totalorder %s9, 3
    %p158 = pnand %p156, %p157
    %p159 = pneg %p158
    // Predicated region
    $region29: #{process_de.3} parent=5 // pred_check
      _
    $region30: #{process_de.3} parent=5 // pred_check_branch
      %161 = sbr.rel (%p158) target = $region32
    $region31: #{process_de.3} parent=5 // pred_region
      %s162 = ssub.s32 %s9, 1
      %p163 = scmp.lt.s32.totalorder %s18, 1
      %s164 = scalar_select %p163, %s18, 1
      %p165 = scmp.lt.s32.totalorder %s19, 0
      %s166 = scalar_select %p165, %s19, 0
      %s167 = smul.addr %s166, 32
      %s168 = smul.addr %s164, 32
      %s169 = sadd.s32 %s167, %s168
      %s170 = smul.addr %s169, 8
      %s171 = scalar_lea.vmem %s0, %s170
      %p172 = pneg %p49
      %p173 = pneg %p46
      %p174 = pneg %p70
      %p175 = pneg %p67
      %p176 = pneg %p91
      %p177 = pneg %p88
      %p178 = pneg %p119
      %p179 = pneg %p116
      %p180 = scmp.lt.s32.totalorder %s18, 1
      %s181 = scalar_select %p180, %s18, 1
      %p182 = scmp.lt.s32.totalorder %s19, 0
      %s183 = scalar_select %p182, %s19, 0
      %s184 = smul.addr %s183, 32
      %s185 = smul.addr %s181, 32
      %s186 = sadd.s32 %s184, %s185
      %s187 = smul.addr %s186, 8
      %s188 = scalar_lea.vmem %s3, %s187
      %p189 = scmp.lt.s32.totalorder %s18, 1
      %s190 = scalar_select %p189, %s18, 1
      %p191 = scmp.lt.s32.totalorder %s19, 0
      %s192 = scalar_select %p191, %s19, 0
      %s193 = smul.addr %s192, 32
      %s194 = smul.addr %s190, 32
      %s195 = sadd.s32 %s193, %s194
      %s196 = smul.addr %s195, 8
      %s197 = scalar_lea.vmem %s0, %s196
      %p198 = scmp.lt.s32.totalorder %s18, 1
      %s199 = scalar_select %p198, %s18, 1
      %p200 = scmp.lt.s32.totalorder %s19, 0
      %s201 = scalar_select %p200, %s19, 0
      %s202 = smul.addr %s201, 32
      %s203 = smul.addr %s199, 32
      %s204 = sadd.s32 %s202, %s203
      %s205 = smul.addr %s204, 8
      %s206 = scalar_lea.vmem %s3, %s205
      %v207 = vld [vmem:[%s197] sm:$0xff]
      %v208 = vld [vmem:[%s197 + $0x8] sm:$0xff]
      %v209 = vld [vmem:[%s197 + $0x10] sm:$0xff]
      %v210 = vld [vmem:[%s197 + $0x18] sm:$0xff]
      %v211 = vld [vmem:[%s197 + $0x20] sm:$0xff]
      %v212 = vld [vmem:[%s197 + $0x28] sm:$0xff]
      %v213 = vld [vmem:[%s197 + $0x30] sm:$0xff]
      %v214 = vld [vmem:[%s197 + $0x38] sm:$0xff]
      %v215 = vld [vmem:[%s197 + $0x40] sm:$0xff]
      %v216 = vld [vmem:[%s197 + $0x48] sm:$0xff]
      %v217 = vld [vmem:[%s197 + $0x50] sm:$0xff]
      %v218 = vld [vmem:[%s197 + $0x58] sm:$0xff]
      %v219 = vld [vmem:[%s197 + $0x60] sm:$0xff]
      %v220 = vld [vmem:[%s197 + $0x68] sm:$0xff]
      %v221 = vld [vmem:[%s197 + $0x70] sm:$0xff]
      %v222 = vld [vmem:[%s197 + $0x78] sm:$0xff]
      %v223 = vld [vmem:[%s197 + $0x80] sm:$0xff]
      %v224 = vld [vmem:[%s197 + $0x88] sm:$0xff]
      %v225 = vld [vmem:[%s197 + $0x90] sm:$0xff]
      %v226 = vld [vmem:[%s197 + $0x98] sm:$0xff]
      %v227 = vld [vmem:[%s197 + $0xa0] sm:$0xff]
      %v228 = vld [vmem:[%s197 + $0xa8] sm:$0xff]
      %v229 = vld [vmem:[%s197 + $0xb0] sm:$0xff]
      %v230 = vld [vmem:[%s197 + $0xb8] sm:$0xff]
      %v231 = vld [vmem:[%s197 + $0xc0] sm:$0xff]
      %v232 = vld [vmem:[%s197 + $0xc8] sm:$0xff]
      %v233 = vld [vmem:[%s197 + $0xd0] sm:$0xff]
      %v234 = vld [vmem:[%s197 + $0xd8] sm:$0xff]
      %v235 = vld [vmem:[%s197 + $0xe0] sm:$0xff]
      %v236 = vld [vmem:[%s197 + $0xe8] sm:$0xff]
      %v237 = vld [vmem:[%s197 + $0xf0] sm:$0xff]
      %v238 = vld [vmem:[%s197 + $0xf8] sm:$0xff]
      %v239 = vld [vmem:[%s1] sm:$0x1]
      %v241 = vlaneseq
      %v242 = vshrl.u32 %v241, 7
      %v243 = vsub.s32 0, %v242
      %v244 = vrot.slane %v239, %v243
      %v246 = vmul.f32 %v207, %v244
      %v247 = vmul.f32 %v208, %v244
      %v248 = vmul.f32 %v209, %v244
      %v249 = vmul.f32 %v210, %v244
      %v250 = vmul.f32 %v211, %v244
      %v251 = vmul.f32 %v212, %v244
      %v252 = vmul.f32 %v213, %v244
      %v253 = vmul.f32 %v214, %v244
      %v254 = vmul.f32 %v215, %v244
      %v255 = vmul.f32 %v216, %v244
      %v256 = vmul.f32 %v217, %v244
      %v257 = vmul.f32 %v218, %v244
      %v258 = vmul.f32 %v219, %v244
      %v259 = vmul.f32 %v220, %v244
      %v260 = vmul.f32 %v221, %v244
      %v261 = vmul.f32 %v222, %v244
      %v262 = vmul.f32 %v223, %v244
      %v263 = vmul.f32 %v224, %v244
      %v264 = vmul.f32 %v225, %v244
      %v265 = vmul.f32 %v226, %v244
      %v266 = vmul.f32 %v227, %v244
      %v267 = vmul.f32 %v228, %v244
      %v268 = vmul.f32 %v229, %v244
      %v269 = vmul.f32 %v230, %v244
      %v270 = vmul.f32 %v231, %v244
      %v271 = vmul.f32 %v232, %v244
      %v272 = vmul.f32 %v233, %v244
      %v273 = vmul.f32 %v234, %v244
      %v274 = vmul.f32 %v235, %v244
      %v275 = vmul.f32 %v236, %v244
      %v276 = vmul.f32 %v237, %v244
      %v277 = vmul.f32 %v238, %v244
      %v278 = vld [vmem:[%s2] sm:$0x1]
      %v280 = vlaneseq
      %v281 = vshrl.u32 %v280, 7
      %v282 = vsub.s32 0, %v281
      %v283 = vrot.slane %v278, %v282
      %v285 = vadd.f32 %v246, %v283
      %v286 = vadd.f32 %v247, %v283
      %v287 = vadd.f32 %v248, %v283
      %v288 = vadd.f32 %v249, %v283
      %v289 = vadd.f32 %v250, %v283
      %v290 = vadd.f32 %v251, %v283
      %v291 = vadd.f32 %v252, %v283
      %v292 = vadd.f32 %v253, %v283
      %v293 = vadd.f32 %v254, %v283
      %v294 = vadd.f32 %v255, %v283
      %v295 = vadd.f32 %v256, %v283
      %v296 = vadd.f32 %v257, %v283
      %v297 = vadd.f32 %v258, %v283
      %v298 = vadd.f32 %v259, %v283
      %v299 = vadd.f32 %v260, %v283
      %v300 = vadd.f32 %v261, %v283
      %v301 = vadd.f32 %v262, %v283
      %v302 = vadd.f32 %v263, %v283
      %v303 = vadd.f32 %v264, %v283
      %v304 = vadd.f32 %v265, %v283
      %v305 = vadd.f32 %v266, %v283
      %v306 = vadd.f32 %v267, %v283
      %v307 = vadd.f32 %v268, %v283
      %v308 = vadd.f32 %v269, %v283
      %v309 = vadd.f32 %v270, %v283
      %v310 = vadd.f32 %v271, %v283
      %v311 = vadd.f32 %v272, %v283
      %v312 = vadd.f32 %v273, %v283
      %v313 = vadd.f32 %v274, %v283
      %v314 = vadd.f32 %v275, %v283
      %v315 = vadd.f32 %v276, %v283
      %v316 = vadd.f32 %v277, %v283
      %v317 = vmax.f32 %v285, 0.0
      %v318 = vmax.f32 %v286, 0.0
      %v319 = vmax.f32 %v287, 0.0
      %v320 = vmax.f32 %v288, 0.0
      %v321 = vmax.f32 %v289, 0.0
      %v322 = vmax.f32 %v290, 0.0
      %v323 = vmax.f32 %v291, 0.0
      %v324 = vmax.f32 %v292, 0.0
      %v325 = vmax.f32 %v293, 0.0
      %v326 = vmax.f32 %v294, 0.0
      %v327 = vmax.f32 %v295, 0.0
      %v328 = vmax.f32 %v296, 0.0
      %v329 = vmax.f32 %v297, 0.0
      %v330 = vmax.f32 %v298, 0.0
      %v331 = vmax.f32 %v299, 0.0
      %v332 = vmax.f32 %v300, 0.0
      %v333 = vmax.f32 %v301, 0.0
      %v334 = vmax.f32 %v302, 0.0
      %v335 = vmax.f32 %v303, 0.0
      %v336 = vmax.f32 %v304, 0.0
      %v337 = vmax.f32 %v305, 0.0
      %v338 = vmax.f32 %v306, 0.0
      %v339 = vmax.f32 %v307, 0.0
      %v340 = vmax.f32 %v308, 0.0
      %v341 = vmax.f32 %v309, 0.0
      %v342 = vmax.f32 %v310, 0.0
      %v343 = vmax.f32 %v311, 0.0
      %v344 = vmax.f32 %v312, 0.0
      %v345 = vmax.f32 %v313, 0.0
      %v346 = vmax.f32 %v314, 0.0
      %v347 = vmax.f32 %v315, 0.0
      %v348 = vmax.f32 %v316, 0.0
      %349 = vst [vmem:[%s206] sm:$0xff] %v317
      %350 = vst [vmem:[%s206 + $0x8] sm:$0xff] %v318
      %351 = vst [vmem:[%s206 + $0x10] sm:$0xff] %v319
      %352 = vst [vmem:[%s206 + $0x18] sm:$0xff] %v320
      %353 = vst [vmem:[%s206 + $0x20] sm:$0xff] %v321
      %354 = vst [vmem:[%s206 + $0x28] sm:$0xff] %v322
      %355 = vst [vmem:[%s206 + $0x30] sm:$0xff] %v323
      %356 = vst [vmem:[%s206 + $0x38] sm:$0xff] %v324
      %357 = vst [vmem:[%s206 + $0x40] sm:$0xff] %v325
      %358 = vst [vmem:[%s206 + $0x48] sm:$0xff] %v326
      %359 = vst [vmem:[%s206 + $0x50] sm:$0xff] %v327
      %360 = vst [vmem:[%s206 + $0x58] sm:$0xff] %v328
      %361 = vst [vmem:[%s206 + $0x60] sm:$0xff] %v329
      %362 = vst [vmem:[%s206 + $0x68] sm:$0xff] %v330
      %363 = vst [vmem:[%s206 + $0x70] sm:$0xff] %v331
      %364 = vst [vmem:[%s206 + $0x78] sm:$0xff] %v332
      %365 = vst [vmem:[%s206 + $0x80] sm:$0xff] %v333
      %366 = vst [vmem:[%s206 + $0x88] sm:$0xff] %v334
      %367 = vst [vmem:[%s206 + $0x90] sm:$0xff] %v335
      %368 = vst [vmem:[%s206 + $0x98] sm:$0xff] %v336
      %369 = vst [vmem:[%s206 + $0xa0] sm:$0xff] %v337
      %370 = vst [vmem:[%s206 + $0xa8] sm:$0xff] %v338
      %371 = vst [vmem:[%s206 + $0xb0] sm:$0xff] %v339
      %372 = vst [vmem:[%s206 + $0xb8] sm:$0xff] %v340
      %373 = vst [vmem:[%s206 + $0xc0] sm:$0xff] %v341
      %374 = vst [vmem:[%s206 + $0xc8] sm:$0xff] %v342
      %375 = vst [vmem:[%s206 + $0xd0] sm:$0xff] %v343
      %376 = vst [vmem:[%s206 + $0xd8] sm:$0xff] %v344
      %377 = vst [vmem:[%s206 + $0xe0] sm:$0xff] %v345
      %378 = vst [vmem:[%s206 + $0xe8] sm:$0xff] %v346
      %379 = vst [vmem:[%s206 + $0xf0] sm:$0xff] %v347
      %380 = vst [vmem:[%s206 + $0xf8] sm:$0xff] %v348
      %p381 = scmp.lt.s32.totalorder %s18, 1
      %s382 = scalar_select %p381, %s18, 1
      %p383 = scmp.lt.s32.totalorder %s19, 0
      %s384 = scalar_select %p383, %s19, 0
      %s385 = smul.addr %s384, 32
      %s386 = smul.addr %s382, 32
      %s387 = sadd.s32 %s385, %s386
      %s388 = smul.addr %s387, 8
      %s389 = scalar_lea.vmem %s3, %s388
      // Predicated region
      $region33: #{process_de.3} parent=31 // pred_check
        %p390 = pneg %p116
      $region34: #{process_de.3} parent=31 // pred_check_branch
        %392 = sbr.rel (%p390) target = $region36
      $region35: #{process_de.3} parent=31 // pred_region
        _
      $region36: #{process_de.3} parent=31 // pred_fallthru
        _
    $region32: #{process_de.3} parent=5 // pred_fallthru
      _
    %p393 = scmp.le.s32.totalorder 2, %s9
    // Predicated region
    $region37: #{process_de.3} parent=5 // pred_check
      %p394 = pneg %p393
    $region38: #{process_de.3} parent=5 // pred_check_branch
      %396 = sbr.rel (%p394) target = $region40
    $region39: #{process_de.3} parent=5 // pred_region
      %s397 = ssub.s32 %s9, 2
      // Predicated region
      $region41: #{process_de.3} parent=39 // pred_check
        %p398 = pneg %p122
      $region42: #{process_de.3} parent=39 // pred_check_branch
        %400 = sbr.rel (%p398) target = $region44
      $region43: #{process_de.3} parent=39 // pred_region
        %p401 = scmp.lt.s32.totalorder %s20, 1
        %s402 = scalar_select %p401, %s20, 1
        %p403 = scmp.lt.s32.totalorder %s21, 0
        %s404 = scalar_select %p403, %s21, 0
        %s405 = smul.addr %s404, 32
        %s406 = smul.addr %s402, 32
        %s407 = sadd.s32 %s405, %s406
        %s408 = smul.addr %s407, 8
        %s409 = scalar_lea.vmem %s3, %s408
      $region44: #{process_de.3} parent=39 // pred_fallthru
        _
    $region40: #{process_de.3} parent=5 // pred_fallthru
      _
  $region6: #{process_de.3} parent=0 // loop_footer
    %s13 = sadd.s32 1, %s9
  $region7: #{process_de.3} parent=0 // loop_footer_branch
    %8 = sbr.rel target = $region3
  $region8: #{process_de.3} parent=0 // loop_exit
    _

// kernel: process_de.2
$region0: #{process_de.2}
  #allocation0 [shape = 'u32[]', space=smem, size = 0x4, offset = 0x4, fixed_abs, tag = 'smem constant byte address 0x4 - core index']
  #allocation1 [shape = 'u32[144,128]{1,0:T(1,128)}', space=vmem, size = 0x12000, scoped, tag = 'internal scratch']
  %s0 = inlined_call_operand.vmem [shape: f32[2,1,18,18,4], index: 0, kind: input, shape index: {}]
  %s1 = inlined_call_operand.vmem [shape: f32[36,128], index: 1, kind: input, shape index: {}]
  %s2 = inlined_call_operand.vmem [shape: f32[2,1,256,128], index: 2, kind: output, shape index: {0}]
  %s3 = inlined_call_operand.vmem [shape: f32[2,1,2,128], index: 3, kind: output, shape index: {1}]
  %4 = xla_tuple %s2, %s3
  %s5 = sld [smem:[#allocation0]]
  $region49: #{process_de.2} parent=0
    _
  %s7 = ssub.s32 1, %s5
  %s8 = scalar_select 0, %s7, %s5
  loop: start=0, step=1, limit=4
  $region2: #{process_de.2} parent=0 // loop_pre_header
    _
  $region3: #{process_de.2} parent=0 // loop_header
    %s10 = sphi 0, %s14
    %p11 = scmp.ge.s32.totalorder %s10, 4
    %s17 = sphi 0, %s29
    %s18 = sphi 0, %s25
    %s19 = sphi 0, %s17
    %s20 = sphi 0, %s18
    %s21 = sphi 0, %s19
    %s22 = sphi 0, %s20
    %s34 = sphi 0, %s36
    %s37 = sphi 0, %s34
    %s38 = sphi 0, %s37
    %s54 = sphi 0, %s38
    %s58 = sphi 0, %s58
    %s60 = sphi 0, %s58
    %s61 = sphi 0, %s60
    %s75 = sphi 0, %s61
    %s83 = sphi 0, %s85
    %s86 = sphi 0, %s83
    %s87 = sphi 0, %s86
    %s103 = sphi 0, %s87
    %s111 = sphi 0, %s113
    %s114 = sphi 0, %s111
    %s115 = sphi 0, %s114
    %s131 = sphi 0, %s115
  $region4: #{process_de.2} parent=0 // loop_header_branch
    %13 = sbr.rel (%p11) target = $region8
  $region5: #{process_de.2} parent=0 // loop_body
    %s15 = ssub.s32 %s10, 1
    %s16 = ssub.s32 %s10, 2
    %s23 = sadd.s32 1, %s18
    %p24 = scmp.ge.s32.totalorder %s23, 1
    %s25 = scalar_select %p24, 0, %s23
    %s26 = sadd.s32 1, %s17
    %s27 = scalar_select %p24, %s26, %s17
    %p28 = scmp.ge.s32.totalorder %s27, 2
    %s29 = scalar_select %p28, 0, %s27
    %s30 = ssub.s32 %s17, %s29
    %s31 = ssub.s32 %s18, %s25
    %s32 = sor.u32 %s30, %s31
    %p33 = scmp.eq.s32.totalorder %s32, 0
    %s35 = sadd.s32 %s34, 1
    %s36 = scalar_select %p33, %s34, %s35
    %p39 = pneg %p33
    %p40 = scmp.eq.s32.totalorder %s10, 1
    %p41 = por %p39, %p40
    %p42 = scmp.ne.s32.totalorder %s34, %s37
    %p43 = scmp.eq.s32.totalorder %s10, 0
    %p44 = por %p42, %p43
    %p45 = scmp.ne.s32.totalorder %s34, %s37
    %p46 = scmp.eq.s32.totalorder %s15, 1
    %p47 = por %p45, %p46
    %p48 = scmp.ne.s32.totalorder %s37, %s38
    %p49 = scmp.eq.s32.totalorder %s15, 0
    %p50 = por %p48, %p49
    %p51 = scmp.ne.s32.totalorder %s37, %s38
    %p52 = scmp.eq.s32.totalorder %s16, 1
    %p53 = por %p51, %p52
    %p55 = scmp.ne.s32.totalorder %s38, %s54
    %p56 = scmp.eq.s32.totalorder %s16, 0
    %p57 = por %p55, %p56
    %s59 = sadd.s32 %s58, 1
    %p62 = scmp.eq.s32.totalorder %s10, 1
    %p63 = scmp.ne.s32.totalorder %s58, %s60
    %p64 = scmp.eq.s32.totalorder %s10, 0
    %p65 = por %p63, %p64
    %p66 = scmp.ne.s32.totalorder %s58, %s60
    %p67 = scmp.eq.s32.totalorder %s15, 1
    %p68 = por %p66, %p67
    %p69 = scmp.ne.s32.totalorder %s60, %s61
    %p70 = scmp.eq.s32.totalorder %s15, 0
    %p71 = por %p69, %p70
    %p72 = scmp.ne.s32.totalorder %s60, %s61
    %p73 = scmp.eq.s32.totalorder %s16, 1
    %p74 = por %p72, %p73
    %p76 = scmp.ne.s32.totalorder %s61, %s75
    %p77 = scmp.eq.s32.totalorder %s16, 0
    %p78 = por %p76, %p77
    %s79 = ssub.s32 %s17, %s29
    %s80 = ssub.s32 %s18, %s25
    %s81 = sor.u32 %s79, %s80
    %p82 = scmp.eq.s32.totalorder %s81, 0
    %s84 = sadd.s32 %s83, 1
    %s85 = scalar_select %p82, %s83, %s84
    %p88 = pneg %p82
    %p89 = scmp.eq.s32.totalorder %s10, 1
    %p90 = por %p88, %p89
    %p91 = scmp.ne.s32.totalorder %s83, %s86
    %p92 = scmp.eq.s32.totalorder %s10, 0
    %p93 = por %p91, %p92
    %p94 = scmp.ne.s32.totalorder %s83, %s86
    %p95 = scmp.eq.s32.totalorder %s15, 1
    %p96 = por %p94, %p95
    %p97 = scmp.ne.s32.totalorder %s86, %s87
    %p98 = scmp.eq.s32.totalorder %s15, 0
    %p99 = por %p97, %p98
    %p100 = scmp.ne.s32.totalorder %s86, %s87
    %p101 = scmp.eq.s32.totalorder %s16, 1
    %p102 = por %p100, %p101
    %p104 = scmp.ne.s32.totalorder %s87, %s103
    %p105 = scmp.eq.s32.totalorder %s16, 0
    %p106 = por %p104, %p105
    %s107 = ssub.s32 %s17, %s29
    %s108 = ssub.s32 %s18, %s25
    %s109 = sor.u32 %s107, %s108
    %p110 = scmp.eq.s32.totalorder %s109, 0
    %s112 = sadd.s32 %s111, 1
    %s113 = scalar_select %p110, %s111, %s112
    %p116 = pneg %p110
    %p117 = scmp.eq.s32.totalorder %s10, 1
    %p118 = por %p116, %p117
    %p119 = scmp.ne.s32.totalorder %s111, %s114
    %p120 = scmp.eq.s32.totalorder %s10, 0
    %p121 = por %p119, %p120
    %p122 = scmp.ne.s32.totalorder %s111, %s114
    %p123 = scmp.eq.s32.totalorder %s15, 1
    %p124 = por %p122, %p123
    %p125 = scmp.ne.s32.totalorder %s114, %s115
    %p126 = scmp.eq.s32.totalorder %s15, 0
    %p127 = por %p125, %p126
    %p128 = scmp.ne.s32.totalorder %s114, %s115
    %p129 = scmp.eq.s32.totalorder %s16, 1
    %p130 = por %p128, %p129
    %p132 = scmp.ne.s32.totalorder %s115, %s131
    %p133 = scmp.eq.s32.totalorder %s16, 0
    %p134 = por %p132, %p133
    %p135 = scmp.le.s32.totalorder 1, %s10
    %p136 = scmp.lt.s32.totalorder %s10, 3
    %p137 = pnand %p135, %p136
    %p138 = pneg %p137
    // Predicated region
    $region9: #{process_de.2} parent=5 // pred_check
      _
    $region10: #{process_de.2} parent=5 // pred_check_branch
      %140 = sbr.rel (%p137) target = $region12
    $region11: #{process_de.2} parent=5 // pred_region
      %s141 = ssub.s32 %s10, 1
      // Predicated region
      $region13: #{process_de.2} parent=11 // pred_check
        %p142 = pneg %p71
      $region14: #{process_de.2} parent=11 // pred_check_branch
        %144 = sbr.rel (%p142) target = $region16
      $region15: #{process_de.2} parent=11 // pred_region
        _
      $region16: #{process_de.2} parent=11 // pred_fallthru
        _
    $region12: #{process_de.2} parent=5 // pred_fallthru
      _
    %p145 = scmp.lt.s32.totalorder %s10, 2
    // Predicated region
    $region17: #{process_de.2} parent=5 // pred_check
      %p146 = pneg %p145
    $region18: #{process_de.2} parent=5 // pred_check_branch
      %148 = sbr.rel (%p146) target = $region20
    $region19: #{process_de.2} parent=5 // pred_region
      // Predicated region
      $region21: #{process_de.2} parent=19 // pred_check
        %p149 = pneg %p44
      $region22: #{process_de.2} parent=19 // pred_check_branch
        %151 = sbr.rel (%p149) target = $region24
      $region23: #{process_de.2} parent=19 // pred_region
        %p152 = scmp.lt.s32.totalorder %s17, 1
        %s153 = scalar_select %p152, %s17, 1
        %p154 = scmp.lt.s32.totalorder %s18, 0
        %s155 = scalar_select %p154, %s18, 0
        %s156 = smul.addr %s155, 54
        %s157 = smul.addr %s153, 54
        %s158 = sadd.s32 %s156, %s157
        %s159 = smul.addr %s158, 8
        %s160 = scalar_lea.vmem %s0, %s159
      $region24: #{process_de.2} parent=19 // pred_fallthru
        _
    $region20: #{process_de.2} parent=5 // pred_fallthru
      _
    %p161 = scmp.le.s32.totalorder 1, %s10
    %p162 = scmp.lt.s32.totalorder %s10, 3
    %p163 = pnand %p161, %p162
    %p164 = pneg %p163
    // Predicated region
    $region25: #{process_de.2} parent=5 // pred_check
      _
    $region26: #{process_de.2} parent=5 // pred_check_branch
      %166 = sbr.rel (%p163) target = $region28
    $region27: #{process_de.2} parent=5 // pred_region
      %s167 = ssub.s32 %s10, 1
      %p168 = scmp.lt.s32.totalorder %s19, 1
      %s169 = scalar_select %p168, %s19, 1
      %p170 = scmp.lt.s32.totalorder %s20, 0
      %s171 = scalar_select %p170, %s20, 0
      %s172 = smul.addr %s171, 54
      %s173 = smul.addr %s169, 54
      %s174 = sadd.s32 %s172, %s173
      %s175 = smul.addr %s174, 8
      %s176 = scalar_lea.vmem %s0, %s175
      %p177 = pneg %p50
      %p178 = pneg %p47
      %p179 = pneg %p71
      %p180 = pneg %p68
      %p181 = pneg %p99
      %p182 = pneg %p96
      %p183 = scmp.lt.s32.totalorder %s19, 1
      %s184 = scalar_select %p183, %s19, 1
      %p185 = scmp.lt.s32.totalorder %s20, 0
      %s186 = scalar_select %p185, %s20, 0
      %s187 = smul.addr %s186, 32
      %s188 = smul.addr %s184, 32
      %s189 = sadd.s32 %s187, %s188
      %s190 = smul.addr %s189, 8
      %s191 = scalar_lea.vmem %s2, %s190
      %p192 = pneg %p127
      %p193 = pneg %p124
      %p194 = scmp.lt.s32.totalorder %s19, 1
      %s195 = scalar_select %p194, %s19, 1
      %p196 = scmp.lt.s32.totalorder %s20, 0
      %s197 = scalar_select %p196, %s20, 0
      %s198 = sadd.s32 %s197, %s195
      %s199 = smul.addr %s198, 2
      %s200 = scalar_lea.vmem %s3, %s199
      %p201 = scmp.lt.s32.totalorder %s19, 1
      %s202 = scalar_select %p201, %s19, 1
      %p203 = scmp.lt.s32.totalorder %s20, 0
      %s204 = scalar_select %p203, %s20, 0
      %s205 = smul.addr %s204, 54
      %s206 = smul.addr %s202, 54
      %s207 = sadd.s32 %s205, %s206
      %s208 = smul.addr %s207, 8
      %s209 = scalar_lea.vmem %s0, %s208
      %p210 = scmp.lt.s32.totalorder %s19, 1
      %s211 = scalar_select %p210, %s19, 1
      %p212 = scmp.lt.s32.totalorder %s20, 0
      %s213 = scalar_select %p212, %s20, 0
      %s214 = smul.addr %s213, 32
      %s215 = smul.addr %s211, 32
      %s216 = sadd.s32 %s214, %s215
      %s217 = smul.addr %s216, 8
      %s218 = scalar_lea.vmem %s2, %s217
      %p219 = scmp.lt.s32.totalorder %s19, 1
      %s220 = scalar_select %p219, %s19, 1
      %p221 = scmp.lt.s32.totalorder %s20, 0
      %s222 = scalar_select %p221, %s20, 0
      %s223 = sadd.s32 %s222, %s220
      %s224 = smul.addr %s223, 2
      %s225 = scalar_lea.vmem %s3, %s224
      %v226 = vld [vmem:[%s209] sm:$0xff]
      %v227 = vld [vmem:[%s209 + $0x8] sm:$0xff]
      %v228 = vld [vmem:[%s209 + $0x10] sm:$0x3]
      %v229 = vld [vmem:[%s209 + $0x18] sm:$0xff]
      %v230 = vld [vmem:[%s209 + $0x20] sm:$0xff]
      %v231 = vld [vmem:[%s209 + $0x28] sm:$0x3]
      %v232 = vld [vmem:[%s209 + $0x30] sm:$0xff]
      %v233 = vld [vmem:[%s209 + $0x38] sm:$0xff]
      %v234 = vld [vmem:[%s209 + $0x40] sm:$0x3]
      %v235 = vld [vmem:[%s209 + $0x48] sm:$0xff]
      %v236 = vld [vmem:[%s209 + $0x50] sm:$0xff]
      %v237 = vld [vmem:[%s209 + $0x58] sm:$0x3]
      %v238 = vld [vmem:[%s209 + $0x60] sm:$0xff]
      %v239 = vld [vmem:[%s209 + $0x68] sm:$0xff]
      %v240 = vld [vmem:[%s209 + $0x70] sm:$0x3]
      %v241 = vld [vmem:[%s209 + $0x78] sm:$0xff]
      %v242 = vld [vmem:[%s209 + $0x80] sm:$0xff]
      %v243 = vld [vmem:[%s209 + $0x88] sm:$0x3]
      %v244 = vld [vmem:[%s209 + $0x90] sm:$0xff]
      %v245 = vld [vmem:[%s209 + $0x98] sm:$0xff]
      %v246 = vld [vmem:[%s209 + $0xa0] sm:$0x3]
      %v247 = vld [vmem:[%s209 + $0xa8] sm:$0xff]
      %v248 = vld [vmem:[%s209 + $0xb0] sm:$0xff]
      %v249 = vld [vmem:[%s209 + $0xb8] sm:$0x3]
      %v250 = vld [vmem:[%s209 + $0xc0] sm:$0xff]
      %v251 = vld [vmem:[%s209 + $0xc8] sm:$0xff]
      %v252 = vld [vmem:[%s209 + $0xd0] sm:$0x3]
      %v253 = vld [vmem:[%s209 + $0xd8] sm:$0xff]
      %v254 = vld [vmem:[%s209 + $0xe0] sm:$0xff]
      %v255 = vld [vmem:[%s209 + $0xe8] sm:$0x3]
      %v256 = vld [vmem:[%s209 + $0xf0] sm:$0xff]
      %v257 = vld [vmem:[%s209 + $0xf8] sm:$0xff]
      %v258 = vld [vmem:[%s209 + $0x100] sm:$0x3]
      %v259 = vld [vmem:[%s209 + $0x108] sm:$0xff]
      %v260 = vld [vmem:[%s209 + $0x110] sm:$0xff]
      %v261 = vld [vmem:[%s209 + $0x118] sm:$0x3]
      %v262 = vld [vmem:[%s209 + $0x120] sm:$0xff]
      %v263 = vld [vmem:[%s209 + $0x128] sm:$0xff]
      %v264 = vld [vmem:[%s209 + $0x130] sm:$0x3]
      %v265 = vld [vmem:[%s209 + $0x138] sm:$0xff]
      %v266 = vld [vmem:[%s209 + $0x140] sm:$0xff]
      %v267 = vld [vmem:[%s209 + $0x148] sm:$0x3]
      %v268 = vld [vmem:[%s209 + $0x150] sm:$0xff]
      %v269 = vld [vmem:[%s209 + $0x158] sm:$0xff]
      %v270 = vld [vmem:[%s209 + $0x160] sm:$0x3]
      %v271 = vld [vmem:[%s209 + $0x168] sm:$0xff]
      %v272 = vld [vmem:[%s209 + $0x170] sm:$0xff]
      %v273 = vld [vmem:[%s209 + $0x178] sm:$0x3]
      %v274 = vld [vmem:[%s209 + $0x180] sm:$0xff]
      %v275 = vld [vmem:[%s209 + $0x188] sm:$0xff]
      %v276 = vld [vmem:[%s209 + $0x190] sm:$0x3]
      %v277 = vld [vmem:[%s209 + $0x198] sm:$0xff]
      %v278 = vld [vmem:[%s209 + $0x1a0] sm:$0xff]
      %v279 = vld [vmem:[%s209 + $0x1a8] sm:$0x3]
      %vm328 = vcmask 1046528
      %v329 = vrot.slane %v226, 1
      %v330 = vrot.slane %v227, 1
      %v331 = vsel %vm328, %v329, %v330
      %v332 = vrot.slane %v228, 1
      %v333 = vsel %vm328, %v330, %v332
      %v334 = vrot.slane %v229, 1
      %v335 = vrot.slane %v230, 1
      %v336 = vsel %vm328, %v334, %v335
      %v337 = vrot.slane %v231, 1
      %v338 = vsel %vm328, %v335, %v337
      %v339 = vrot.slane %v232, 1
      %v340 = vrot.slane %v233, 1
      %v341 = vsel %vm328, %v339, %v340
      %v342 = vrot.slane %v234, 1
      %v343 = vsel %vm328, %v340, %v342
      %v344 = vrot.slane %v235, 1
      %v345 = vrot.slane %v236, 1
      %v346 = vsel %vm328, %v344, %v345
      %v347 = vrot.slane %v237, 1
      %v348 = vsel %vm328, %v345, %v347
      %v349 = vrot.slane %v238, 1
      %v350 = vrot.slane %v239, 1
      %v351 = vsel %vm328, %v349, %v350
      %v352 = vrot.slane %v240, 1
      %v353 = vsel %vm328, %v350, %v352
      %v354 = vrot.slane %v241, 1
      %v355 = vrot.slane %v242, 1
      %v356 = vsel %vm328, %v354, %v355
      %v357 = vrot.slane %v243, 1
      %v358 = vsel %vm328, %v355, %v357
      %v359 = vrot.slane %v244, 1
      %v360 = vrot.slane %v245, 1
      %v361 = vsel %vm328, %v359, %v360
      %v362 = vrot.slane %v246, 1
      %v363 = vsel %vm328, %v360, %v362
      %v364 = vrot.slane %v247, 1
      %v365 = vrot.slane %v248, 1
      %v366 = vsel %vm328, %v364, %v365
      %v367 = vrot.slane %v249, 1
      %v368 = vsel %vm328, %v365, %v367
      %v369 = vrot.slane %v250, 1
      %v370 = vrot.slane %v251, 1
      %v371 = vsel %vm328, %v369, %v370
      %v372 = vrot.slane %v252, 1
      %v373 = vsel %vm328, %v370, %v372
      %v374 = vrot.slane %v253, 1
      %v375 = vrot.slane %v254, 1
      %v376 = vsel %vm328, %v374, %v375
      %v377 = vrot.slane %v255, 1
      %v378 = vsel %vm328, %v375, %v377
      %v379 = vrot.slane %v256, 1
      %v380 = vrot.slane %v257, 1
      %v381 = vsel %vm328, %v379, %v380
      %v382 = vrot.slane %v258, 1
      %v383 = vsel %vm328, %v380, %v382
      %v384 = vrot.slane %v259, 1
      %v385 = vrot.slane %v260, 1
      %v386 = vsel %vm328, %v384, %v385
      %v387 = vrot.slane %v261, 1
      %v388 = vsel %vm328, %v385, %v387
      %v389 = vrot.slane %v262, 1
      %v390 = vrot.slane %v263, 1
      %v391 = vsel %vm328, %v389, %v390
      %v392 = vrot.slane %v264, 1
      %v393 = vsel %vm328, %v390, %v392
      %v394 = vrot.slane %v265, 1
      %v395 = vrot.slane %v266, 1
      %v396 = vsel %vm328, %v394, %v395
      %v397 = vrot.slane %v267, 1
      %v398 = vsel %vm328, %v395, %v397
      %v399 = vrot.slane %v268, 1
      %v400 = vrot.slane %v269, 1
      %v401 = vsel %vm328, %v399, %v400
      %v402 = vrot.slane %v270, 1
      %v403 = vsel %vm328, %v400, %v402
      %v404 = vrot.slane %v271, 1
      %v405 = vrot.slane %v272, 1
      %v406 = vsel %vm328, %v404, %v405
      %v407 = vrot.slane %v273, 1
      %v408 = vsel %vm328, %v405, %v407
      %vm409 = vcmask 1045504
      %v410 = vrot.slane %v226, 2
      %v411 = vrot.slane %v227, 2
      %v412 = vsel %vm409, %v410, %v411
      %v413 = vrot.slane %v228, 2
      %v414 = vsel %vm409, %v411, %v413
      %v415 = vrot.slane %v229, 2
      %v416 = vrot.slane %v230, 2
      %v417 = vsel %vm409, %v415, %v416
      %v418 = vrot.slane %v231, 2
      %v419 = vsel %vm409, %v416, %v418
      %v420 = vrot.slane %v232, 2
      %v421 = vrot.slane %v233, 2
      %v422 = vsel %vm409, %v420, %v421
      %v423 = vrot.slane %v234, 2
      %v424 = vsel %vm409, %v421, %v423
      %v425 = vrot.slane %v235, 2
      %v426 = vrot.slane %v236, 2
      %v427 = vsel %vm409, %v425, %v426
      %v428 = vrot.slane %v237, 2
      %v429 = vsel %vm409, %v426, %v428
      %v430 = vrot.slane %v238, 2
      %v431 = vrot.slane %v239, 2
      %v432 = vsel %vm409, %v430, %v431
      %v433 = vrot.slane %v240, 2
      %v434 = vsel %vm409, %v431, %v433
      %v435 = vrot.slane %v241, 2
      %v436 = vrot.slane %v242, 2
      %v437 = vsel %vm409, %v435, %v436
      %v438 = vrot.slane %v243, 2
      %v439 = vsel %vm409, %v436, %v438
      %v440 = vrot.slane %v244, 2
      %v441 = vrot.slane %v245, 2
      %v442 = vsel %vm409, %v440, %v441
      %v443 = vrot.slane %v246, 2
      %v444 = vsel %vm409, %v441, %v443
      %v445 = vrot.slane %v247, 2
      %v446 = vrot.slane %v248, 2
      %v447 = vsel %vm409, %v445, %v446
      %v448 = vrot.slane %v249, 2
      %v449 = vsel %vm409, %v446, %v448
      %v450 = vrot.slane %v250, 2
      %v451 = vrot.slane %v251, 2
      %v452 = vsel %vm409, %v450, %v451
      %v453 = vrot.slane %v252, 2
      %v454 = vsel %vm409, %v451, %v453
      %v455 = vrot.slane %v253, 2
      %v456 = vrot.slane %v254, 2
      %v457 = vsel %vm409, %v455, %v456
      %v458 = vrot.slane %v255, 2
      %v459 = vsel %vm409, %v456, %v458
      %v460 = vrot.slane %v256, 2
      %v461 = vrot.slane %v257, 2
      %v462 = vsel %vm409, %v460, %v461
      %v463 = vrot.slane %v258, 2
      %v464 = vsel %vm409, %v461, %v463
      %v465 = vrot.slane %v259, 2
      %v466 = vrot.slane %v260, 2
      %v467 = vsel %vm409, %v465, %v466
      %v468 = vrot.slane %v261, 2
      %v469 = vsel %vm409, %v466, %v468
      %v470 = vrot.slane %v262, 2
      %v471 = vrot.slane %v263, 2
      %v472 = vsel %vm409, %v470, %v471
      %v473 = vrot.slane %v264, 2
      %v474 = vsel %vm409, %v471, %v473
      %v475 = vrot.slane %v265, 2
      %v476 = vrot.slane %v266, 2
      %v477 = vsel %vm409, %v475, %v476
      %v478 = vrot.slane %v267, 2
      %v479 = vsel %vm409, %v476, %v478
      %v480 = vrot.slane %v268, 2
      %v481 = vrot.slane %v269, 2
      %v482 = vsel %vm409, %v480, %v481
      %v483 = vrot.slane %v270, 2
      %v484 = vsel %vm409, %v481, %v483
      %v485 = vrot.slane %v271, 2
      %v486 = vrot.slane %v272, 2
      %v487 = vsel %vm409, %v485, %v486
      %v488 = vrot.slane %v273, 2
      %v489 = vsel %vm409, %v486, %v488
      %v493 = vrot.slane %v274, 1
      %v494 = vrot.slane %v275, 1
      %v495 = vsel %vm328, %v493, %v494
      %v496 = vrot.slane %v276, 1
      %v497 = vsel %vm328, %v494, %v496
      %v498 = vrot.slane %v274, 2
      %v499 = vrot.slane %v275, 2
      %v500 = vsel %vm409, %v498, %v499
      %v501 = vrot.slane %v276, 2
      %v502 = vsel %vm409, %v499, %v501
      %v506 = vrot.slane %v277, 1
      %v507 = vrot.slane %v278, 1
      %v508 = vsel %vm328, %v506, %v507
      %v509 = vrot.slane %v279, 1
      %v510 = vsel %vm328, %v507, %v509
      %v511 = vrot.slane %v277, 2
      %v512 = vrot.slane %v278, 2
      %v513 = vsel %vm409, %v511, %v512
      %v514 = vrot.slane %v279, 2
      %v515 = vsel %vm409, %v512, %v514
      %516 = vrot.lane.b32.xlu0 %v331, 4
      %v517 = vpop.permute.xlu0 %516
      %518 = vrot.lane.b32.xlu0 %v333, 4
      %v519 = vpop.permute.xlu0 %518
      %520 = vrot.lane.b32.xlu0 %v336, 4
      %v521 = vpop.permute.xlu0 %520
      %522 = vrot.lane.b32.xlu0 %v338, 4
      %v523 = vpop.permute.xlu0 %522
      %524 = vrot.lane.b32.xlu0 %v341, 4
      %v525 = vpop.permute.xlu0 %524
      %526 = vrot.lane.b32.xlu0 %v343, 4
      %v527 = vpop.permute.xlu0 %526
      %528 = vrot.lane.b32.xlu0 %v346, 4
      %v529 = vpop.permute.xlu0 %528
      %530 = vrot.lane.b32.xlu0 %v348, 4
      %v531 = vpop.permute.xlu0 %530
      %532 = vrot.lane.b32.xlu0 %v351, 4
      %v533 = vpop.permute.xlu0 %532
      %534 = vrot.lane.b32.xlu0 %v353, 4
      %v535 = vpop.permute.xlu0 %534
      %536 = vrot.lane.b32.xlu0 %v356, 4
      %v537 = vpop.permute.xlu0 %536
      %538 = vrot.lane.b32.xlu0 %v358, 4
      %v539 = vpop.permute.xlu0 %538
      %540 = vrot.lane.b32.xlu0 %v361, 4
      %v541 = vpop.permute.xlu0 %540
      %542 = vrot.lane.b32.xlu0 %v363, 4
      %v543 = vpop.permute.xlu0 %542
      %544 = vrot.lane.b32.xlu0 %v366, 4
      %v545 = vpop.permute.xlu0 %544
      %546 = vrot.lane.b32.xlu0 %v368, 4
      %v547 = vpop.permute.xlu0 %546
      %548 = vrot.lane.b32.xlu0 %v371, 4
      %v549 = vpop.permute.xlu0 %548
      %550 = vrot.lane.b32.xlu0 %v373, 4
      %v551 = vpop.permute.xlu0 %550
      %552 = vrot.lane.b32.xlu0 %v376, 4
      %v553 = vpop.permute.xlu0 %552
      %554 = vrot.lane.b32.xlu0 %v378, 4
      %v555 = vpop.permute.xlu0 %554
      %556 = vrot.lane.b32.xlu0 %v381, 4
      %v557 = vpop.permute.xlu0 %556
      %558 = vrot.lane.b32.xlu0 %v383, 4
      %v559 = vpop.permute.xlu0 %558
      %560 = vrot.lane.b32.xlu0 %v386, 4
      %v561 = vpop.permute.xlu0 %560
      %562 = vrot.lane.b32.xlu0 %v388, 4
      %v563 = vpop.permute.xlu0 %562
      %564 = vrot.lane.b32.xlu0 %v391, 4
      %v565 = vpop.permute.xlu0 %564
      %566 = vrot.lane.b32.xlu0 %v393, 4
      %v567 = vpop.permute.xlu0 %566
      %568 = vrot.lane.b32.xlu0 %v396, 4
      %v569 = vpop.permute.xlu0 %568
      %570 = vrot.lane.b32.xlu0 %v398, 4
      %v571 = vpop.permute.xlu0 %570
      %572 = vrot.lane.b32.xlu0 %v401, 4
      %v573 = vpop.permute.xlu0 %572
      %574 = vrot.lane.b32.xlu0 %v403, 4
      %v575 = vpop.permute.xlu0 %574
      %576 = vrot.lane.b32.xlu0 %v406, 4
      %v577 = vpop.permute.xlu0 %576
      %578 = vrot.lane.b32.xlu0 %v408, 4
      %v579 = vpop.permute.xlu0 %578
      %612 = vrot.lane.b32.xlu0 %v412, 8
      %v613 = vpop.permute.xlu0 %612
      %614 = vrot.lane.b32.xlu0 %v414, 8
      %v615 = vpop.permute.xlu0 %614
      %616 = vrot.lane.b32.xlu0 %v417, 8
      %v617 = vpop.permute.xlu0 %616
      %618 = vrot.lane.b32.xlu0 %v419, 8
      %v619 = vpop.permute.xlu0 %618
      %620 = vrot.lane.b32.xlu0 %v422, 8
      %v621 = vpop.permute.xlu0 %620
      %622 = vrot.lane.b32.xlu0 %v424, 8
      %v623 = vpop.permute.xlu0 %622
      %624 = vrot.lane.b32.xlu0 %v427, 8
      %v625 = vpop.permute.xlu0 %624
      %626 = vrot.lane.b32.xlu0 %v429, 8
      %v627 = vpop.permute.xlu0 %626
      %628 = vrot.lane.b32.xlu0 %v432, 8
      %v629 = vpop.permute.xlu0 %628
      %630 = vrot.lane.b32.xlu0 %v434, 8
      %v631 = vpop.permute.xlu0 %630
      %632 = vrot.lane.b32.xlu0 %v437, 8
      %v633 = vpop.permute.xlu0 %632
      %634 = vrot.lane.b32.xlu0 %v439, 8
      %v635 = vpop.permute.xlu0 %634
      %636 = vrot.lane.b32.xlu0 %v442, 8
      %v637 = vpop.permute.xlu0 %636
      %638 = vrot.lane.b32.xlu0 %v444, 8
      %v639 = vpop.permute.xlu0 %638
      %640 = vrot.lane.b32.xlu0 %v447, 8
      %v641 = vpop.permute.xlu0 %640
      %642 = vrot.lane.b32.xlu0 %v449, 8
      %v643 = vpop.permute.xlu0 %642
      %644 = vrot.lane.b32.xlu0 %v452, 8
      %v645 = vpop.permute.xlu0 %644
      %646 = vrot.lane.b32.xlu0 %v454, 8
      %v647 = vpop.permute.xlu0 %646
      %648 = vrot.lane.b32.xlu0 %v457, 8
      %v649 = vpop.permute.xlu0 %648
      %650 = vrot.lane.b32.xlu0 %v459, 8
      %v651 = vpop.permute.xlu0 %650
      %652 = vrot.lane.b32.xlu0 %v462, 8
      %v653 = vpop.permute.xlu0 %652
      %654 = vrot.lane.b32.xlu0 %v464, 8
      %v655 = vpop.permute.xlu0 %654
      %656 = vrot.lane.b32.xlu0 %v467, 8
      %v657 = vpop.permute.xlu0 %656
      %658 = vrot.lane.b32.xlu0 %v469, 8
      %v659 = vpop.permute.xlu0 %658
      %660 = vrot.lane.b32.xlu0 %v472, 8
      %v661 = vpop.permute.xlu0 %660
      %662 = vrot.lane.b32.xlu0 %v474, 8
      %v663 = vpop.permute.xlu0 %662
      %664 = vrot.lane.b32.xlu0 %v477, 8
      %v665 = vpop.permute.xlu0 %664
      %666 = vrot.lane.b32.xlu0 %v479, 8
      %v667 = vpop.permute.xlu0 %666
      %668 = vrot.lane.b32.xlu0 %v482, 8
      %v669 = vpop.permute.xlu0 %668
      %670 = vrot.lane.b32.xlu0 %v484, 8
      %v671 = vpop.permute.xlu0 %670
      %672 = vrot.lane.b32.xlu0 %v487, 8
      %v673 = vpop.permute.xlu0 %672
      %674 = vrot.lane.b32.xlu0 %v489, 8
      %v675 = vpop.permute.xlu0 %674
      %708 = vrot.lane.b32.xlu0 %v229, 12
      %v709 = vpop.permute.xlu0 %708
      %710 = vrot.lane.b32.xlu0 %v230, 12
      %v711 = vpop.permute.xlu0 %710
      %712 = vrot.lane.b32.xlu0 %v232, 12
      %v713 = vpop.permute.xlu0 %712
      %714 = vrot.lane.b32.xlu0 %v233, 12
      %v715 = vpop.permute.xlu0 %714
      %716 = vrot.lane.b32.xlu0 %v235, 12
      %v717 = vpop.permute.xlu0 %716
      %718 = vrot.lane.b32.xlu0 %v236, 12
      %v719 = vpop.permute.xlu0 %718
      %720 = vrot.lane.b32.xlu0 %v238, 12
      %v721 = vpop.permute.xlu0 %720
      %722 = vrot.lane.b32.xlu0 %v239, 12
      %v723 = vpop.permute.xlu0 %722
      %724 = vrot.lane.b32.xlu0 %v241, 12
      %v725 = vpop.permute.xlu0 %724
      %726 = vrot.lane.b32.xlu0 %v242, 12
      %v727 = vpop.permute.xlu0 %726
      %728 = vrot.lane.b32.xlu0 %v244, 12
      %v729 = vpop.permute.xlu0 %728
      %730 = vrot.lane.b32.xlu0 %v245, 12
      %v731 = vpop.permute.xlu0 %730
      %732 = vrot.lane.b32.xlu0 %v247, 12
      %v733 = vpop.permute.xlu0 %732
      %734 = vrot.lane.b32.xlu0 %v248, 12
      %v735 = vpop.permute.xlu0 %734
      %736 = vrot.lane.b32.xlu0 %v250, 12
      %v737 = vpop.permute.xlu0 %736
      %738 = vrot.lane.b32.xlu0 %v251, 12
      %v739 = vpop.permute.xlu0 %738
      %740 = vrot.lane.b32.xlu0 %v253, 12
      %v741 = vpop.permute.xlu0 %740
      %742 = vrot.lane.b32.xlu0 %v254, 12
      %v743 = vpop.permute.xlu0 %742
      %744 = vrot.lane.b32.xlu0 %v256, 12
      %v745 = vpop.permute.xlu0 %744
      %746 = vrot.lane.b32.xlu0 %v257, 12
      %v747 = vpop.permute.xlu0 %746
      %748 = vrot.lane.b32.xlu0 %v259, 12
      %v749 = vpop.permute.xlu0 %748
      %750 = vrot.lane.b32.xlu0 %v260, 12
      %v751 = vpop.permute.xlu0 %750
      %752 = vrot.lane.b32.xlu0 %v262, 12
      %v753 = vpop.permute.xlu0 %752
      %754 = vrot.lane.b32.xlu0 %v263, 12
      %v755 = vpop.permute.xlu0 %754
      %756 = vrot.lane.b32.xlu0 %v265, 12
      %v757 = vpop.permute.xlu0 %756
      %758 = vrot.lane.b32.xlu0 %v266, 12
      %v759 = vpop.permute.xlu0 %758
      %760 = vrot.lane.b32.xlu0 %v268, 12
      %v761 = vpop.permute.xlu0 %760
      %762 = vrot.lane.b32.xlu0 %v269, 12
      %v763 = vpop.permute.xlu0 %762
      %764 = vrot.lane.b32.xlu0 %v271, 12
      %v765 = vpop.permute.xlu0 %764
      %766 = vrot.lane.b32.xlu0 %v272, 12
      %v767 = vpop.permute.xlu0 %766
      %768 = vrot.lane.b32.xlu0 %v274, 12
      %v769 = vpop.permute.xlu0 %768
      %770 = vrot.lane.b32.xlu0 %v275, 12
      %v771 = vpop.permute.xlu0 %770
      %804 = vrot.lane.b32.xlu0 %v336, 16
      %v805 = vpop.permute.xlu0 %804
      %806 = vrot.lane.b32.xlu0 %v338, 16
      %v807 = vpop.permute.xlu0 %806
      %808 = vrot.lane.b32.xlu0 %v341, 16
      %v809 = vpop.permute.xlu0 %808
      %810 = vrot.lane.b32.xlu0 %v343, 16
      %v811 = vpop.permute.xlu0 %810
      %812 = vrot.lane.b32.xlu0 %v346, 16
      %v813 = vpop.permute.xlu0 %812
      %814 = vrot.lane.b32.xlu0 %v348, 16
      %v815 = vpop.permute.xlu0 %814
      %816 = vrot.lane.b32.xlu0 %v351, 16
      %v817 = vpop.permute.xlu0 %816
      %818 = vrot.lane.b32.xlu0 %v353, 16
      %v819 = vpop.permute.xlu0 %818
      %820 = vrot.lane.b32.xlu0 %v356, 16
      %v821 = vpop.permute.xlu0 %820
      %822 = vrot.lane.b32.xlu0 %v358, 16
      %v823 = vpop.permute.xlu0 %822
      %824 = vrot.lane.b32.xlu0 %v361, 16
      %v825 = vpop.permute.xlu0 %824
      %826 = vrot.lane.b32.xlu0 %v363, 16
      %v827 = vpop.permute.xlu0 %826
      %828 = vrot.lane.b32.xlu0 %v366, 16
      %v829 = vpop.permute.xlu0 %828
      %830 = vrot.lane.b32.xlu0 %v368, 16
      %v831 = vpop.permute.xlu0 %830
      %832 = vrot.lane.b32.xlu0 %v371, 16
      %v833 = vpop.permute.xlu0 %832
      %834 = vrot.lane.b32.xlu0 %v373, 16
      %v835 = vpop.permute.xlu0 %834
      %836 = vrot.lane.b32.xlu0 %v376, 16
      %v837 = vpop.permute.xlu0 %836
      %838 = vrot.lane.b32.xlu0 %v378, 16
      %v839 = vpop.permute.xlu0 %838
      %840 = vrot.lane.b32.xlu0 %v381, 16
      %v841 = vpop.permute.xlu0 %840
      %842 = vrot.lane.b32.xlu0 %v383, 16
      %v843 = vpop.permute.xlu0 %842
      %844 = vrot.lane.b32.xlu0 %v386, 16
      %v845 = vpop.permute.xlu0 %844
      %846 = vrot.lane.b32.xlu0 %v388, 16
      %v847 = vpop.permute.xlu0 %846
      %848 = vrot.lane.b32.xlu0 %v391, 16
      %v849 = vpop.permute.xlu0 %848
      %850 = vrot.lane.b32.xlu0 %v393, 16
      %v851 = vpop.permute.xlu0 %850
      %852 = vrot.lane.b32.xlu0 %v396, 16
      %v853 = vpop.permute.xlu0 %852
      %854 = vrot.lane.b32.xlu0 %v398, 16
      %v855 = vpop.permute.xlu0 %854
      %856 = vrot.lane.b32.xlu0 %v401, 16
      %v857 = vpop.permute.xlu0 %856
      %858 = vrot.lane.b32.xlu0 %v403, 16
      %v859 = vpop.permute.xlu0 %858
      %860 = vrot.lane.b32.xlu0 %v406, 16
      %v861 = vpop.permute.xlu0 %860
      %862 = vrot.lane.b32.xlu0 %v408, 16
      %v863 = vpop.permute.xlu0 %862
      %864 = vrot.lane.b32.xlu0 %v495, 16
      %v865 = vpop.permute.xlu0 %864
      %866 = vrot.lane.b32.xlu0 %v497, 16
      %v867 = vpop.permute.xlu0 %866
      %900 = vrot.lane.b32.xlu0 %v417, 20
      %v901 = vpop.permute.xlu0 %900
      %902 = vrot.lane.b32.xlu0 %v419, 20
      %v903 = vpop.permute.xlu0 %902
      %904 = vrot.lane.b32.xlu0 %v422, 20
      %v905 = vpop.permute.xlu0 %904
      %906 = vrot.lane.b32.xlu0 %v424, 20
      %v907 = vpop.permute.xlu0 %906
      %908 = vrot.lane.b32.xlu0 %v427, 20
      %v909 = vpop.permute.xlu0 %908
      %910 = vrot.lane.b32.xlu0 %v429, 20
      %v911 = vpop.permute.xlu0 %910
      %912 = vrot.lane.b32.xlu0 %v432, 20
      %v913 = vpop.permute.xlu0 %912
      %914 = vrot.lane.b32.xlu0 %v434, 20
      %v915 = vpop.permute.xlu0 %914
      %916 = vrot.lane.b32.xlu0 %v437, 20
      %v917 = vpop.permute.xlu0 %916
      %918 = vrot.lane.b32.xlu0 %v439, 20
      %v919 = vpop.permute.xlu0 %918
      %920 = vrot.lane.b32.xlu0 %v442, 20
      %v921 = vpop.permute.xlu0 %920
      %922 = vrot.lane.b32.xlu0 %v444, 20
      %v923 = vpop.permute.xlu0 %922
      %924 = vrot.lane.b32.xlu0 %v447, 20
      %v925 = vpop.permute.xlu0 %924
      %926 = vrot.lane.b32.xlu0 %v449, 20
      %v927 = vpop.permute.xlu0 %926
      %928 = vrot.lane.b32.xlu0 %v452, 20
      %v929 = vpop.permute.xlu0 %928
      %930 = vrot.lane.b32.xlu0 %v454, 20
      %v931 = vpop.permute.xlu0 %930
      %932 = vrot.lane.b32.xlu0 %v457, 20
      %v933 = vpop.permute.xlu0 %932
      %934 = vrot.lane.b32.xlu0 %v459, 20
      %v935 = vpop.permute.xlu0 %934
      %936 = vrot.lane.b32.xlu0 %v462, 20
      %v937 = vpop.permute.xlu0 %936
      %938 = vrot.lane.b32.xlu0 %v464, 20
      %v939 = vpop.permute.xlu0 %938
      %940 = vrot.lane.b32.xlu0 %v467, 20
      %v941 = vpop.permute.xlu0 %940
      %942 = vrot.lane.b32.xlu0 %v469, 20
      %v943 = vpop.permute.xlu0 %942
      %944 = vrot.lane.b32.xlu0 %v472, 20
      %v945 = vpop.permute.xlu0 %944
      %946 = vrot.lane.b32.xlu0 %v474, 20
      %v947 = vpop.permute.xlu0 %946
      %948 = vrot.lane.b32.xlu0 %v477, 20
      %v949 = vpop.permute.xlu0 %948
      %950 = vrot.lane.b32.xlu0 %v479, 20
      %v951 = vpop.permute.xlu0 %950
      %952 = vrot.lane.b32.xlu0 %v482, 20
      %v953 = vpop.permute.xlu0 %952
      %954 = vrot.lane.b32.xlu0 %v484, 20
      %v955 = vpop.permute.xlu0 %954
      %956 = vrot.lane.b32.xlu0 %v487, 20
      %v957 = vpop.permute.xlu0 %956
      %958 = vrot.lane.b32.xlu0 %v489, 20
      %v959 = vpop.permute.xlu0 %958
      %960 = vrot.lane.b32.xlu0 %v500, 20
      %v961 = vpop.permute.xlu0 %960
      %962 = vrot.lane.b32.xlu0 %v502, 20
      %v963 = vpop.permute.xlu0 %962
      %996 = vrot.lane.b32.xlu0 %v232, 24
      %v997 = vpop.permute.xlu0 %996
      %998 = vrot.lane.b32.xlu0 %v233, 24
      %v999 = vpop.permute.xlu0 %998
      %1000 = vrot.lane.b32.xlu0 %v235, 24
      %v1001 = vpop.permute.xlu0 %1000
      %1002 = vrot.lane.b32.xlu0 %v236, 24
      %v1003 = vpop.permute.xlu0 %1002
      %1004 = vrot.lane.b32.xlu0 %v238, 24
      %v1005 = vpop.permute.xlu0 %1004
      %1006 = vrot.lane.b32.xlu0 %v239, 24
      %v1007 = vpop.permute.xlu0 %1006
      %1008 = vrot.lane.b32.xlu0 %v241, 24
      %v1009 = vpop.permute.xlu0 %1008
      %1010 = vrot.lane.b32.xlu0 %v242, 24
      %v1011 = vpop.permute.xlu0 %1010
      %1012 = vrot.lane.b32.xlu0 %v244, 24
      %v1013 = vpop.permute.xlu0 %1012
      %1014 = vrot.lane.b32.xlu0 %v245, 24
      %v1015 = vpop.permute.xlu0 %1014
      %1016 = vrot.lane.b32.xlu0 %v247, 24
      %v1017 = vpop.permute.xlu0 %1016
      %1018 = vrot.lane.b32.xlu0 %v248, 24
      %v1019 = vpop.permute.xlu0 %1018
      %1020 = vrot.lane.b32.xlu0 %v250, 24
      %v1021 = vpop.permute.xlu0 %1020
      %1022 = vrot.lane.b32.xlu0 %v251, 24
      %v1023 = vpop.permute.xlu0 %1022
      %1024 = vrot.lane.b32.xlu0 %v253, 24
      %v1025 = vpop.permute.xlu0 %1024
      %1026 = vrot.lane.b32.xlu0 %v254, 24
      %v1027 = vpop.permute.xlu0 %1026
      %1028 = vrot.lane.b32.xlu0 %v256, 24
      %v1029 = vpop.permute.xlu0 %1028
      %1030 = vrot.lane.b32.xlu0 %v257, 24
      %v1031 = vpop.permute.xlu0 %1030
      %1032 = vrot.lane.b32.xlu0 %v259, 24
      %v1033 = vpop.permute.xlu0 %1032
      %1034 = vrot.lane.b32.xlu0 %v260, 24
      %v1035 = vpop.permute.xlu0 %1034
      %1036 = vrot.lane.b32.xlu0 %v262, 24
      %v1037 = vpop.permute.xlu0 %1036
      %1038 = vrot.lane.b32.xlu0 %v263, 24
      %v1039 = vpop.permute.xlu0 %1038
      %1040 = vrot.lane.b32.xlu0 %v265, 24
      %v1041 = vpop.permute.xlu0 %1040
      %1042 = vrot.lane.b32.xlu0 %v266, 24
      %v1043 = vpop.permute.xlu0 %1042
      %1044 = vrot.lane.b32.xlu0 %v268, 24
      %v1045 = vpop.permute.xlu0 %1044
      %1046 = vrot.lane.b32.xlu0 %v269, 24
      %v1047 = vpop.permute.xlu0 %1046
      %1048 = vrot.lane.b32.xlu0 %v271, 24
      %v1049 = vpop.permute.xlu0 %1048
      %1050 = vrot.lane.b32.xlu0 %v272, 24
      %v1051 = vpop.permute.xlu0 %1050
      %1052 = vrot.lane.b32.xlu0 %v274, 24
      %v1053 = vpop.permute.xlu0 %1052
      %1054 = vrot.lane.b32.xlu0 %v275, 24
      %v1055 = vpop.permute.xlu0 %1054
      %1056 = vrot.lane.b32.xlu0 %v277, 24
      %v1057 = vpop.permute.xlu0 %1056
      %1058 = vrot.lane.b32.xlu0 %v278, 24
      %v1059 = vpop.permute.xlu0 %1058
      %1092 = vrot.lane.b32.xlu0 %v341, 28
      %v1093 = vpop.permute.xlu0 %1092
      %1094 = vrot.lane.b32.xlu0 %v343, 28
      %v1095 = vpop.permute.xlu0 %1094
      %1096 = vrot.lane.b32.xlu0 %v346, 28
      %v1097 = vpop.permute.xlu0 %1096
      %1098 = vrot.lane.b32.xlu0 %v348, 28
      %v1099 = vpop.permute.xlu0 %1098
      %1100 = vrot.lane.b32.xlu0 %v351, 28
      %v1101 = vpop.permute.xlu0 %1100
      %1102 = vrot.lane.b32.xlu0 %v353, 28
      %v1103 = vpop.permute.xlu0 %1102
      %1104 = vrot.lane.b32.xlu0 %v356, 28
      %v1105 = vpop.permute.xlu0 %1104
      %1106 = vrot.lane.b32.xlu0 %v358, 28
      %v1107 = vpop.permute.xlu0 %1106
      %1108 = vrot.lane.b32.xlu0 %v361, 28
      %v1109 = vpop.permute.xlu0 %1108
      %1110 = vrot.lane.b32.xlu0 %v363, 28
      %v1111 = vpop.permute.xlu0 %1110
      %1112 = vrot.lane.b32.xlu0 %v366, 28
      %v1113 = vpop.permute.xlu0 %1112
      %1114 = vrot.lane.b32.xlu0 %v368, 28
      %v1115 = vpop.permute.xlu0 %1114
      %1116 = vrot.lane.b32.xlu0 %v371, 28
      %v1117 = vpop.permute.xlu0 %1116
      %1118 = vrot.lane.b32.xlu0 %v373, 28
      %v1119 = vpop.permute.xlu0 %1118
      %1120 = vrot.lane.b32.xlu0 %v376, 28
      %v1121 = vpop.permute.xlu0 %1120
      %1122 = vrot.lane.b32.xlu0 %v378, 28
      %v1123 = vpop.permute.xlu0 %1122
      %1124 = vrot.lane.b32.xlu0 %v381, 28
      %v1125 = vpop.permute.xlu0 %1124
      %1126 = vrot.lane.b32.xlu0 %v383, 28
      %v1127 = vpop.permute.xlu0 %1126
      %1128 = vrot.lane.b32.xlu0 %v386, 28
      %v1129 = vpop.permute.xlu0 %1128
      %1130 = vrot.lane.b32.xlu0 %v388, 28
      %v1131 = vpop.permute.xlu0 %1130
      %1132 = vrot.lane.b32.xlu0 %v391, 28
      %v1133 = vpop.permute.xlu0 %1132
      %1134 = vrot.lane.b32.xlu0 %v393, 28
      %v1135 = vpop.permute.xlu0 %1134
      %1136 = vrot.lane.b32.xlu0 %v396, 28
      %v1137 = vpop.permute.xlu0 %1136
      %1138 = vrot.lane.b32.xlu0 %v398, 28
      %v1139 = vpop.permute.xlu0 %1138
      %1140 = vrot.lane.b32.xlu0 %v401, 28
      %v1141 = vpop.permute.xlu0 %1140
      %1142 = vrot.lane.b32.xlu0 %v403, 28
      %v1143 = vpop.permute.xlu0 %1142
      %1144 = vrot.lane.b32.xlu0 %v406, 28
      %v1145 = vpop.permute.xlu0 %1144
      %1146 = vrot.lane.b32.xlu0 %v408, 28
      %v1147 = vpop.permute.xlu0 %1146
      %1148 = vrot.lane.b32.xlu0 %v495, 28
      %v1149 = vpop.permute.xlu0 %1148
      %1150 = vrot.lane.b32.xlu0 %v497, 28
      %v1151 = vpop.permute.xlu0 %1150
      %1152 = vrot.lane.b32.xlu0 %v508, 28
      %v1153 = vpop.permute.xlu0 %1152
      %1154 = vrot.lane.b32.xlu0 %v510, 28
      %v1155 = vpop.permute.xlu0 %1154
      %1188 = vrot.lane.b32.xlu0 %v422, 32
      %v1189 = vpop.permute.xlu0 %1188
      %1190 = vrot.lane.b32.xlu0 %v424, 32
      %v1191 = vpop.permute.xlu0 %1190
      %1192 = vrot.lane.b32.xlu0 %v427, 32
      %v1193 = vpop.permute.xlu0 %1192
      %1194 = vrot.lane.b32.xlu0 %v429, 32
      %v1195 = vpop.permute.xlu0 %1194
      %1196 = vrot.lane.b32.xlu0 %v432, 32
      %v1197 = vpop.permute.xlu0 %1196
      %1198 = vrot.lane.b32.xlu0 %v434, 32
      %v1199 = vpop.permute.xlu0 %1198
      %1200 = vrot.lane.b32.xlu0 %v437, 32
      %v1201 = vpop.permute.xlu0 %1200
      %1202 = vrot.lane.b32.xlu0 %v439, 32
      %v1203 = vpop.permute.xlu0 %1202
      %1204 = vrot.lane.b32.xlu0 %v442, 32
      %v1205 = vpop.permute.xlu0 %1204
      %1206 = vrot.lane.b32.xlu0 %v444, 32
      %v1207 = vpop.permute.xlu0 %1206
      %1208 = vrot.lane.b32.xlu0 %v447, 32
      %v1209 = vpop.permute.xlu0 %1208
      %1210 = vrot.lane.b32.xlu0 %v449, 32
      %v1211 = vpop.permute.xlu0 %1210
      %1212 = vrot.lane.b32.xlu0 %v452, 32
      %v1213 = vpop.permute.xlu0 %1212
      %1214 = vrot.lane.b32.xlu0 %v454, 32
      %v1215 = vpop.permute.xlu0 %1214
      %1216 = vrot.lane.b32.xlu0 %v457, 32
      %v1217 = vpop.permute.xlu0 %1216
      %1218 = vrot.lane.b32.xlu0 %v459, 32
      %v1219 = vpop.permute.xlu0 %1218
      %1220 = vrot.lane.b32.xlu0 %v462, 32
      %v1221 = vpop.permute.xlu0 %1220
      %1222 = vrot.lane.b32.xlu0 %v464, 32
      %v1223 = vpop.permute.xlu0 %1222
      %1224 = vrot.lane.b32.xlu0 %v467, 32
      %v1225 = vpop.permute.xlu0 %1224
      %1226 = vrot.lane.b32.xlu0 %v469, 32
      %v1227 = vpop.permute.xlu0 %1226
      %1228 = vrot.lane.b32.xlu0 %v472, 32
      %v1229 = vpop.permute.xlu0 %1228
      %1230 = vrot.lane.b32.xlu0 %v474, 32
      %v1231 = vpop.permute.xlu0 %1230
      %1232 = vrot.lane.b32.xlu0 %v477, 32
      %v1233 = vpop.permute.xlu0 %1232
      %1234 = vrot.lane.b32.xlu0 %v479, 32
      %v1235 = vpop.permute.xlu0 %1234
      %1236 = vrot.lane.b32.xlu0 %v482, 32
      %v1237 = vpop.permute.xlu0 %1236
      %1238 = vrot.lane.b32.xlu0 %v484, 32
      %v1239 = vpop.permute.xlu0 %1238
      %1240 = vrot.lane.b32.xlu0 %v487, 32
      %v1241 = vpop.permute.xlu0 %1240
      %1242 = vrot.lane.b32.xlu0 %v489, 32
      %v1243 = vpop.permute.xlu0 %1242
      %1244 = vrot.lane.b32.xlu0 %v500, 32
      %v1245 = vpop.permute.xlu0 %1244
      %1246 = vrot.lane.b32.xlu0 %v502, 32
      %v1247 = vpop.permute.xlu0 %1246
      %1248 = vrot.lane.b32.xlu0 %v513, 32
      %v1249 = vpop.permute.xlu0 %1248
      %1250 = vrot.lane.b32.xlu0 %v515, 32
      %v1251 = vpop.permute.xlu0 %1250
      %vm1284 = vcmask 31744
      %v1285 = vsel %vm1284, %v226, %v517
      %v1286 = vsel %vm1284, %v227, %v519
      %v1287 = vsel %vm1284, %v229, %v521
      %v1288 = vsel %vm1284, %v230, %v523
      %v1289 = vsel %vm1284, %v232, %v525
      %v1290 = vsel %vm1284, %v233, %v527
      %v1291 = vsel %vm1284, %v235, %v529
      %v1292 = vsel %vm1284, %v236, %v531
      %v1293 = vsel %vm1284, %v238, %v533
      %v1294 = vsel %vm1284, %v239, %v535
      %v1295 = vsel %vm1284, %v241, %v537
      %v1296 = vsel %vm1284, %v242, %v539
      %v1297 = vsel %vm1284, %v244, %v541
      %v1298 = vsel %vm1284, %v245, %v543
      %v1299 = vsel %vm1284, %v247, %v545
      %v1300 = vsel %vm1284, %v248, %v547
      %v1301 = vsel %vm1284, %v250, %v549
      %v1302 = vsel %vm1284, %v251, %v551
      %v1303 = vsel %vm1284, %v253, %v553
      %v1304 = vsel %vm1284, %v254, %v555
      %v1305 = vsel %vm1284, %v256, %v557
      %v1306 = vsel %vm1284, %v257, %v559
      %v1307 = vsel %vm1284, %v259, %v561
      %v1308 = vsel %vm1284, %v260, %v563
      %v1309 = vsel %vm1284, %v262, %v565
      %v1310 = vsel %vm1284, %v263, %v567
      %v1311 = vsel %vm1284, %v265, %v569
      %v1312 = vsel %vm1284, %v266, %v571
      %v1313 = vsel %vm1284, %v268, %v573
      %v1314 = vsel %vm1284, %v269, %v575
      %v1315 = vsel %vm1284, %v271, %v577
      %v1316 = vsel %vm1284, %v272, %v579
      %vm1317 = vcmask 64512
      %v1318 = vsel %vm1317, %v1285, %v613
      %v1319 = vsel %vm1317, %v1286, %v615
      %v1320 = vsel %vm1317, %v1287, %v617
      %v1321 = vsel %vm1317, %v1288, %v619
      %v1322 = vsel %vm1317, %v1289, %v621
      %v1323 = vsel %vm1317, %v1290, %v623
      %v1324 = vsel %vm1317, %v1291, %v625
      %v1325 = vsel %vm1317, %v1292, %v627
      %v1326 = vsel %vm1317, %v1293, %v629
      %v1327 = vsel %vm1317, %v1294, %v631
      %v1328 = vsel %vm1317, %v1295, %v633
      %v1329 = vsel %vm1317, %v1296, %v635
      %v1330 = vsel %vm1317, %v1297, %v637
      %v1331 = vsel %vm1317, %v1298, %v639
      %v1332 = vsel %vm1317, %v1299, %v641
      %v1333 = vsel %vm1317, %v1300, %v643
      %v1334 = vsel %vm1317, %v1301, %v645
      %v1335 = vsel %vm1317, %v1302, %v647
      %v1336 = vsel %vm1317, %v1303, %v649
      %v1337 = vsel %vm1317, %v1304, %v651
      %v1338 = vsel %vm1317, %v1305, %v653
      %v1339 = vsel %vm1317, %v1306, %v655
      %v1340 = vsel %vm1317, %v1307, %v657
      %v1341 = vsel %vm1317, %v1308, %v659
      %v1342 = vsel %vm1317, %v1309, %v661
      %v1343 = vsel %vm1317, %v1310, %v663
      %v1344 = vsel %vm1317, %v1311, %v665
      %v1345 = vsel %vm1317, %v1312, %v667
      %v1346 = vsel %vm1317, %v1313, %v669
      %v1347 = vsel %vm1317, %v1314, %v671
      %v1348 = vsel %vm1317, %v1315, %v673
      %v1349 = vsel %vm1317, %v1316, %v675
      %vm1350 = vcmask 97280
      %v1351 = vsel %vm1350, %v1318, %v709
      %v1352 = vsel %vm1350, %v1319, %v711
      %v1353 = vsel %vm1350, %v1320, %v713
      %v1354 = vsel %vm1350, %v1321, %v715
      %v1355 = vsel %vm1350, %v1322, %v717
      %v1356 = vsel %vm1350, %v1323, %v719
      %v1357 = vsel %vm1350, %v1324, %v721
      %v1358 = vsel %vm1350, %v1325, %v723
      %v1359 = vsel %vm1350, %v1326, %v725
      %v1360 = vsel %vm1350, %v1327, %v727
      %v1361 = vsel %vm1350, %v1328, %v729
      %v1362 = vsel %vm1350, %v1329, %v731
      %v1363 = vsel %vm1350, %v1330, %v733
      %v1364 = vsel %vm1350, %v1331, %v735
      %v1365 = vsel %vm1350, %v1332, %v737
      %v1366 = vsel %vm1350, %v1333, %v739
      %v1367 = vsel %vm1350, %v1334, %v741
      %v1368 = vsel %vm1350, %v1335, %v743
      %v1369 = vsel %vm1350, %v1336, %v745
      %v1370 = vsel %vm1350, %v1337, %v747
      %v1371 = vsel %vm1350, %v1338, %v749
      %v1372 = vsel %vm1350, %v1339, %v751
      %v1373 = vsel %vm1350, %v1340, %v753
      %v1374 = vsel %vm1350, %v1341, %v755
      %v1375 = vsel %vm1350, %v1342, %v757
      %v1376 = vsel %vm1350, %v1343, %v759
      %v1377 = vsel %vm1350, %v1344, %v761
      %v1378 = vsel %vm1350, %v1345, %v763
      %v1379 = vsel %vm1350, %v1346, %v765
      %v1380 = vsel %vm1350, %v1347, %v767
      %v1381 = vsel %vm1350, %v1348, %v769
      %v1382 = vsel %vm1350, %v1349, %v771
      %vm1383 = vcmask 130048
      %v1384 = vsel %vm1383, %v1351, %v805
      %v1385 = vsel %vm1383, %v1352, %v807
      %v1386 = vsel %vm1383, %v1353, %v809
      %v1387 = vsel %vm1383, %v1354, %v811
      %v1388 = vsel %vm1383, %v1355, %v813
      %v1389 = vsel %vm1383, %v1356, %v815
      %v1390 = vsel %vm1383, %v1357, %v817
      %v1391 = vsel %vm1383, %v1358, %v819
      %v1392 = vsel %vm1383, %v1359, %v821
      %v1393 = vsel %vm1383, %v1360, %v823
      %v1394 = vsel %vm1383, %v1361, %v825
      %v1395 = vsel %vm1383, %v1362, %v827
      %v1396 = vsel %vm1383, %v1363, %v829
      %v1397 = vsel %vm1383, %v1364, %v831
      %v1398 = vsel %vm1383, %v1365, %v833
      %v1399 = vsel %vm1383, %v1366, %v835
      %v1400 = vsel %vm1383, %v1367, %v837
      %v1401 = vsel %vm1383, %v1368, %v839
      %v1402 = vsel %vm1383, %v1369, %v841
      %v1403 = vsel %vm1383, %v1370, %v843
      %v1404 = vsel %vm1383, %v1371, %v845
      %v1405 = vsel %vm1383, %v1372, %v847
      %v1406 = vsel %vm1383, %v1373, %v849
      %v1407 = vsel %vm1383, %v1374, %v851
      %v1408 = vsel %vm1383, %v1375, %v853
      %v1409 = vsel %vm1383, %v1376, %v855
      %v1410 = vsel %vm1383, %v1377, %v857
      %v1411 = vsel %vm1383, %v1378, %v859
      %v1412 = vsel %vm1383, %v1379, %v861
      %v1413 = vsel %vm1383, %v1380, %v863
      %v1414 = vsel %vm1383, %v1381, %v865
      %v1415 = vsel %vm1383, %v1382, %v867
      %vm1416 = vcmask 162816
      %v1417 = vsel %vm1416, %v1384, %v901
      %v1418 = vsel %vm1416, %v1385, %v903
      %v1419 = vsel %vm1416, %v1386, %v905
      %v1420 = vsel %vm1416, %v1387, %v907
      %v1421 = vsel %vm1416, %v1388, %v909
      %v1422 = vsel %vm1416, %v1389, %v911
      %v1423 = vsel %vm1416, %v1390, %v913
      %v1424 = vsel %vm1416, %v1391, %v915
      %v1425 = vsel %vm1416, %v1392, %v917
      %v1426 = vsel %vm1416, %v1393, %v919
      %v1427 = vsel %vm1416, %v1394, %v921
      %v1428 = vsel %vm1416, %v1395, %v923
      %v1429 = vsel %vm1416, %v1396, %v925
      %v1430 = vsel %vm1416, %v1397, %v927
      %v1431 = vsel %vm1416, %v1398, %v929
      %v1432 = vsel %vm1416, %v1399, %v931
      %v1433 = vsel %vm1416, %v1400, %v933
      %v1434 = vsel %vm1416, %v1401, %v935
      %v1435 = vsel %vm1416, %v1402, %v937
      %v1436 = vsel %vm1416, %v1403, %v939
      %v1437 = vsel %vm1416, %v1404, %v941
      %v1438 = vsel %vm1416, %v1405, %v943
      %v1439 = vsel %vm1416, %v1406, %v945
      %v1440 = vsel %vm1416, %v1407, %v947
      %v1441 = vsel %vm1416, %v1408, %v949
      %v1442 = vsel %vm1416, %v1409, %v951
      %v1443 = vsel %vm1416, %v1410, %v953
      %v1444 = vsel %vm1416, %v1411, %v955
      %v1445 = vsel %vm1416, %v1412, %v957
      %v1446 = vsel %vm1416, %v1413, %v959
      %v1447 = vsel %vm1416, %v1414, %v961
      %v1448 = vsel %vm1416, %v1415, %v963
      %vm1449 = vcmask 195584
      %v1450 = vsel %vm1449, %v1417, %v997
      %v1451 = vsel %vm1449, %v1418, %v999
      %v1452 = vsel %vm1449, %v1419, %v1001
      %v1453 = vsel %vm1449, %v1420, %v1003
      %v1454 = vsel %vm1449, %v1421, %v1005
      %v1455 = vsel %vm1449, %v1422, %v1007
      %v1456 = vsel %vm1449, %v1423, %v1009
      %v1457 = vsel %vm1449, %v1424, %v1011
      %v1458 = vsel %vm1449, %v1425, %v1013
      %v1459 = vsel %vm1449, %v1426, %v1015
      %v1460 = vsel %vm1449, %v1427, %v1017
      %v1461 = vsel %vm1449, %v1428, %v1019
      %v1462 = vsel %vm1449, %v1429, %v1021
      %v1463 = vsel %vm1449, %v1430, %v1023
      %v1464 = vsel %vm1449, %v1431, %v1025
      %v1465 = vsel %vm1449, %v1432, %v1027
      %v1466 = vsel %vm1449, %v1433, %v1029
      %v1467 = vsel %vm1449, %v1434, %v1031
      %v1468 = vsel %vm1449, %v1435, %v1033
      %v1469 = vsel %vm1449, %v1436, %v1035
      %v1470 = vsel %vm1449, %v1437, %v1037
      %v1471 = vsel %vm1449, %v1438, %v1039
      %v1472 = vsel %vm1449, %v1439, %v1041
      %v1473 = vsel %vm1449, %v1440, %v1043
      %v1474 = vsel %vm1449, %v1441, %v1045
      %v1475 = vsel %vm1449, %v1442, %v1047
      %v1476 = vsel %vm1449, %v1443, %v1049
      %v1477 = vsel %vm1449, %v1444, %v1051
      %v1478 = vsel %vm1449, %v1445, %v1053
      %v1479 = vsel %vm1449, %v1446, %v1055
      %v1480 = vsel %vm1449, %v1447, %v1057
      %v1481 = vsel %vm1449, %v1448, %v1059
      %vm1482 = vcmask 228352
      %v1483 = vsel %vm1482, %v1450, %v1093
      %v1484 = vsel %vm1482, %v1451, %v1095
      %v1485 = vsel %vm1482, %v1452, %v1097
      %v1486 = vsel %vm1482, %v1453, %v1099
      %v1487 = vsel %vm1482, %v1454, %v1101
      %v1488 = vsel %vm1482, %v1455, %v1103
      %v1489 = vsel %vm1482, %v1456, %v1105
      %v1490 = vsel %vm1482, %v1457, %v1107
      %v1491 = vsel %vm1482, %v1458, %v1109
      %v1492 = vsel %vm1482, %v1459, %v1111
      %v1493 = vsel %vm1482, %v1460, %v1113
      %v1494 = vsel %vm1482, %v1461, %v1115
      %v1495 = vsel %vm1482, %v1462, %v1117
      %v1496 = vsel %vm1482, %v1463, %v1119
      %v1497 = vsel %vm1482, %v1464, %v1121
      %v1498 = vsel %vm1482, %v1465, %v1123
      %v1499 = vsel %vm1482, %v1466, %v1125
      %v1500 = vsel %vm1482, %v1467, %v1127
      %v1501 = vsel %vm1482, %v1468, %v1129
      %v1502 = vsel %vm1482, %v1469, %v1131
      %v1503 = vsel %vm1482, %v1470, %v1133
      %v1504 = vsel %vm1482, %v1471, %v1135
      %v1505 = vsel %vm1482, %v1472, %v1137
      %v1506 = vsel %vm1482, %v1473, %v1139
      %v1507 = vsel %vm1482, %v1474, %v1141
      %v1508 = vsel %vm1482, %v1475, %v1143
      %v1509 = vsel %vm1482, %v1476, %v1145
      %v1510 = vsel %vm1482, %v1477, %v1147
      %v1511 = vsel %vm1482, %v1478, %v1149
      %v1512 = vsel %vm1482, %v1479, %v1151
      %v1513 = vsel %vm1482, %v1480, %v1153
      %v1514 = vsel %vm1482, %v1481, %v1155
      %vm1515 = vcmask 261120
      %v1516 = vsel %vm1515, %v1483, %v1189
      %v1517 = vsel %vm1515, %v1484, %v1191
      %v1518 = vsel %vm1515, %v1485, %v1193
      %v1519 = vsel %vm1515, %v1486, %v1195
      %v1520 = vsel %vm1515, %v1487, %v1197
      %v1521 = vsel %vm1515, %v1488, %v1199
      %v1522 = vsel %vm1515, %v1489, %v1201
      %v1523 = vsel %vm1515, %v1490, %v1203
      %v1524 = vsel %vm1515, %v1491, %v1205
      %v1525 = vsel %vm1515, %v1492, %v1207
      %v1526 = vsel %vm1515, %v1493, %v1209
      %v1527 = vsel %vm1515, %v1494, %v1211
      %v1528 = vsel %vm1515, %v1495, %v1213
      %v1529 = vsel %vm1515, %v1496, %v1215
      %v1530 = vsel %vm1515, %v1497, %v1217
      %v1531 = vsel %vm1515, %v1498, %v1219
      %v1532 = vsel %vm1515, %v1499, %v1221
      %v1533 = vsel %vm1515, %v1500, %v1223
      %v1534 = vsel %vm1515, %v1501, %v1225
      %v1535 = vsel %vm1515, %v1502, %v1227
      %v1536 = vsel %vm1515, %v1503, %v1229
      %v1537 = vsel %vm1515, %v1504, %v1231
      %v1538 = vsel %vm1515, %v1505, %v1233
      %v1539 = vsel %vm1515, %v1506, %v1235
      %v1540 = vsel %vm1515, %v1507, %v1237
      %v1541 = vsel %vm1515, %v1508, %v1239
      %v1542 = vsel %vm1515, %v1509, %v1241
      %v1543 = vsel %vm1515, %v1510, %v1243
      %v1544 = vsel %vm1515, %v1511, %v1245
      %v1545 = vsel %vm1515, %v1512, %v1247
      %v1546 = vsel %vm1515, %v1513, %v1249
      %v1547 = vsel %vm1515, %v1514, %v1251
      %v1548 = vld [vmem:[%s1] sm:$0xff]
      %v1549 = vld [vmem:[%s1 + $0x8] sm:$0xff]
      %v1550 = vld [vmem:[%s1 + $0x10] sm:$0xff]
      %v1551 = vld [vmem:[%s1 + $0x18] sm:$0xff]
      %v1552 = vld [vmem:[%s1 + $0x20] sm:$0xf]
      %vm1553 = vcmask 293888
      %v1555 = vsel %vm1553, %v1516, 0
      %v1558 = vsel %vm1553, %v1517, 0
      %v1561 = vsel %vm1553, %v1518, 0
      %v1564 = vsel %vm1553, %v1519, 0
      %v1567 = vsel %vm1553, %v1520, 0
      %v1570 = vsel %vm1553, %v1521, 0
      %v1573 = vsel %vm1553, %v1522, 0
      %v1576 = vsel %vm1553, %v1523, 0
      %v1579 = vsel %vm1553, %v1524, 0
      %v1582 = vsel %vm1553, %v1525, 0
      %v1585 = vsel %vm1553, %v1526, 0
      %v1588 = vsel %vm1553, %v1527, 0
      %v1591 = vsel %vm1553, %v1528, 0
      %v1594 = vsel %vm1553, %v1529, 0
      %v1597 = vsel %vm1553, %v1530, 0
      %v1600 = vsel %vm1553, %v1531, 0
      %v1603 = vsel %vm1553, %v1532, 0
      %v1606 = vsel %vm1553, %v1533, 0
      %v1609 = vsel %vm1553, %v1534, 0
      %v1612 = vsel %vm1553, %v1535, 0
      %v1615 = vsel %vm1553, %v1536, 0
      %v1618 = vsel %vm1553, %v1537, 0
      %v1621 = vsel %vm1553, %v1538, 0
      %v1624 = vsel %vm1553, %v1539, 0
      %v1627 = vsel %vm1553, %v1540, 0
      %v1630 = vsel %vm1553, %v1541, 0
      %v1633 = vsel %vm1553, %v1542, 0
      %v1636 = vsel %vm1553, %v1543, 0
      %v1639 = vsel %vm1553, %v1544, 0
      %v1642 = vsel %vm1553, %v1545, 0
      %v1645 = vsel %vm1553, %v1546, 0
      %v1648 = vsel %vm1553, %v1547, 0
      %vm1650 = vcmask 1043456
      %v1652 = vsel %vm1650, %v1552, 0
      %1654 = vmatprep.subr.mxu0 0.0
      %1655 = vmatpush1.msra.mxu0 0.0
      %1656 = vmatprep.subr.mxu0 0.0
      %1657 = vmatpush1.msra.mxu0 0.0
      %1658 = vmatprep.subr.mxu0 0.0
      %1659 = vmatpush1.msra.mxu0 0.0
      %1660 = vmatprep.subr.mxu0 0.0
      %1661 = vmatpush1.msra.mxu0 0.0
      %1662 = vmatprep.subr.mxu0 0.0
      %1663 = vmatpush1.msra.mxu0 0.0
      %1664 = vmatprep.subr.mxu0 0.0
      %1665 = vmatpush1.msra.mxu0 0.0
      %1666 = vmatprep.subr.mxu0 0.0
      %1667 = vmatpush1.msra.mxu0 0.0
      %1668 = vmatprep.subr.mxu0 0.0
      %1669 = vmatpush1.msra.mxu0 0.0
      %1670 = vmatprep.subr.mxu0 0.0
      %1671 = vmatpush1.msra.mxu0 0.0
      %1672 = vmatprep.subr.mxu0 0.0
      %1673 = vmatpush1.msra.mxu0 0.0
      %1674 = vmatprep.subr.mxu0 0.0
      %1675 = vmatpush1.msra.mxu0 0.0
      %1676 = vmatprep.subr.mxu0 0.0
      %1677 = vmatpush1.msra.mxu0 %v1652
      %1678 = vmatprep.subr.mxu0 0.0
      %1679 = vmatpush1.msra.mxu0 %v1551
      %1680 = vmatprep.subr.mxu0 0.0
      %1681 = vmatpush1.msra.mxu0 %v1550
      %1682 = vmatprep.subr.mxu0 0.0
      %1683 = vmatpush1.msra.mxu0 %v1549
      %1684 = vmatprep.subr.mxu0 0.0
      %1685 = vmatpush1.msra.mxu0 %v1548
      %1686 = vmatprep.subr.mxu0 0.0
      %1687 = vmatpush2.msra.mxu0 0.0
      %1688 = vmatprep.subr.mxu0 0.0
      %1689 = vmatpush2.msra.mxu0 0.0
      %1690 = vmatprep.subr.mxu0 0.0
      %1691 = vmatpush2.msra.mxu0 0.0
      %1692 = vmatprep.subr.mxu0 0.0
      %1693 = vmatpush2.msra.mxu0 0.0
      %1694 = vmatprep.subr.mxu0 0.0
      %1695 = vmatpush2.msra.mxu0 0.0
      %1696 = vmatprep.subr.mxu0 0.0
      %1697 = vmatpush2.msra.mxu0 0.0
      %1698 = vmatprep.subr.mxu0 0.0
      %1699 = vmatpush2.msra.mxu0 0.0
      %1700 = vmatprep.subr.mxu0 0.0
      %1701 = vmatpush2.msra.mxu0 0.0
      %1702 = vmatprep.subr.mxu0 0.0
      %1703 = vmatpush2.msra.mxu0 0.0
      %1704 = vmatprep.subr.mxu0 0.0
      %1705 = vmatpush2.msra.mxu0 0.0
      %1706 = vmatprep.subr.mxu0 0.0
      %1707 = vmatpush2.msra.mxu0 0.0
      %1708 = vmatprep.subr.mxu0 0.0
      %1709 = vmatpush2.msra.mxu0 0.0
      %1710 = vmatprep.subr.mxu0 0.0
      %1711 = vmatpush2.msra.mxu0 0.0
      %1712 = vmatprep.subr.mxu0 0.0
      %1713 = vmatpush2.msra.mxu0 0.0
      %1714 = vmatprep.subr.mxu0 0.0
      %1715 = vmatpush2.msra.mxu0 0.0
      %1716 = vmatprep.subr.mxu0 0.0
      %1717 = vmatpush2.msra.mxu0 0.0
      %1718 = vmatprep.mubr.f32.mxu0 0.0
      %1719 = vmatmul.mubr.f32.gmra.mxu0 %v1555
      %v1720 = vpop.f32.mrf.mxu0
      %v1721 = vadd.f32 0.0, %v1720
      %v1722 = vpop.f32.mrf.mxu0
      %1723 = vmatprep.mubr.f32.mxu0 0.0
      %1724 = vmatmul.mubr.f32.gmra.mxu0 %v1558
      %v1725 = vpop.f32.mrf.mxu0
      %v1726 = vadd.f32 0.0, %v1725
      %v1727 = vpop.f32.mrf.mxu0
      %1728 = vmatprep.mubr.f32.mxu0 0.0
      %1729 = vmatmul.mubr.f32.gmra.mxu0 %v1561
      %v1730 = vpop.f32.mrf.mxu0
      %v1731 = vadd.f32 0.0, %v1730
      %v1732 = vpop.f32.mrf.mxu0
      %1733 = vmatprep.mubr.f32.mxu0 0.0
      %1734 = vmatmul.mubr.f32.gmra.mxu0 %v1564
      %v1735 = vpop.f32.mrf.mxu0
      %v1736 = vadd.f32 0.0, %v1735
      %v1737 = vpop.f32.mrf.mxu0
      %1738 = vmatprep.mubr.f32.mxu0 0.0
      %1739 = vmatmul.mubr.f32.gmra.mxu0 %v1567
      %v1740 = vpop.f32.mrf.mxu0
      %v1741 = vadd.f32 0.0, %v1740
      %v1742 = vpop.f32.mrf.mxu0
      %1743 = vmatprep.mubr.f32.mxu0 0.0
      %1744 = vmatmul.mubr.f32.gmra.mxu0 %v1570
      %v1745 = vpop.f32.mrf.mxu0
      %v1746 = vadd.f32 0.0, %v1745
      %v1747 = vpop.f32.mrf.mxu0
      %1748 = vmatprep.mubr.f32.mxu0 0.0
      %1749 = vmatmul.mubr.f32.gmra.mxu0 %v1573
      %v1750 = vpop.f32.mrf.mxu0
      %v1751 = vadd.f32 0.0, %v1750
      %v1752 = vpop.f32.mrf.mxu0
      %1753 = vmatprep.mubr.f32.mxu0 0.0
      %1754 = vmatmul.mubr.f32.gmra.mxu0 %v1576
      %v1755 = vpop.f32.mrf.mxu0
      %v1756 = vadd.f32 0.0, %v1755
      %v1757 = vpop.f32.mrf.mxu0
      %1758 = vmatprep.mubr.f32.mxu0 0.0
      %1759 = vmatmul.mubr.f32.gmra.mxu0 %v1579
      %v1760 = vpop.f32.mrf.mxu0
      %v1761 = vadd.f32 0.0, %v1760
      %v1762 = vpop.f32.mrf.mxu0
      %1763 = vmatprep.mubr.f32.mxu0 0.0
      %1764 = vmatmul.mubr.f32.gmra.mxu0 %v1582
      %v1765 = vpop.f32.mrf.mxu0
      %v1766 = vadd.f32 0.0, %v1765
      %v1767 = vpop.f32.mrf.mxu0
      %1768 = vmatprep.mubr.f32.mxu0 0.0
      %1769 = vmatmul.mubr.f32.gmra.mxu0 %v1585
      %v1770 = vpop.f32.mrf.mxu0
      %v1771 = vadd.f32 0.0, %v1770
      %v1772 = vpop.f32.mrf.mxu0
      %1773 = vmatprep.mubr.f32.mxu0 0.0
      %1774 = vmatmul.mubr.f32.gmra.mxu0 %v1588
      %v1775 = vpop.f32.mrf.mxu0
      %v1776 = vadd.f32 0.0, %v1775
      %v1777 = vpop.f32.mrf.mxu0
      %1778 = vmatprep.mubr.f32.mxu0 0.0
      %1779 = vmatmul.mubr.f32.gmra.mxu0 %v1591
      %v1780 = vpop.f32.mrf.mxu0
      %v1781 = vadd.f32 0.0, %v1780
      %v1782 = vpop.f32.mrf.mxu0
      %1783 = vmatprep.mubr.f32.mxu0 0.0
      %1784 = vmatmul.mubr.f32.gmra.mxu0 %v1594
      %v1785 = vpop.f32.mrf.mxu0
      %v1786 = vadd.f32 0.0, %v1785
      %v1787 = vpop.f32.mrf.mxu0
      %1788 = vmatprep.mubr.f32.mxu0 0.0
      %1789 = vmatmul.mubr.f32.gmra.mxu0 %v1597
      %v1790 = vpop.f32.mrf.mxu0
      %v1791 = vadd.f32 0.0, %v1790
      %v1792 = vpop.f32.mrf.mxu0
      %1793 = vmatprep.mubr.f32.mxu0 0.0
      %1794 = vmatmul.mubr.f32.gmra.mxu0 %v1600
      %v1795 = vpop.f32.mrf.mxu0
      %v1796 = vadd.f32 0.0, %v1795
      %v1797 = vpop.f32.mrf.mxu0
      %1798 = vmatprep.mubr.f32.mxu0 0.0
      %1799 = vmatmul.mubr.f32.gmra.mxu0 %v1603
      %v1800 = vpop.f32.mrf.mxu0
      %v1801 = vadd.f32 0.0, %v1800
      %v1802 = vpop.f32.mrf.mxu0
      %1803 = vmatprep.mubr.f32.mxu0 0.0
      %1804 = vmatmul.mubr.f32.gmra.mxu0 %v1606
      %v1805 = vpop.f32.mrf.mxu0
      %v1806 = vadd.f32 0.0, %v1805
      %v1807 = vpop.f32.mrf.mxu0
      %1808 = vmatprep.mubr.f32.mxu0 0.0
      %1809 = vmatmul.mubr.f32.gmra.mxu0 %v1609
      %v1810 = vpop.f32.mrf.mxu0
      %v1811 = vadd.f32 0.0, %v1810
      %v1812 = vpop.f32.mrf.mxu0
      %1813 = vmatprep.mubr.f32.mxu0 0.0
      %1814 = vmatmul.mubr.f32.gmra.mxu0 %v1612
      %v1815 = vpop.f32.mrf.mxu0
      %v1816 = vadd.f32 0.0, %v1815
      %v1817 = vpop.f32.mrf.mxu0
      %1818 = vmatprep.mubr.f32.mxu0 0.0
      %1819 = vmatmul.mubr.f32.gmra.mxu0 %v1615
      %v1820 = vpop.f32.mrf.mxu0
      %v1821 = vadd.f32 0.0, %v1820
      %v1822 = vpop.f32.mrf.mxu0
      %1823 = vmatprep.mubr.f32.mxu0 0.0
      %1824 = vmatmul.mubr.f32.gmra.mxu0 %v1618
      %v1825 = vpop.f32.mrf.mxu0
      %v1826 = vadd.f32 0.0, %v1825
      %v1827 = vpop.f32.mrf.mxu0
      %1828 = vmatprep.mubr.f32.mxu0 0.0
      %1829 = vmatmul.mubr.f32.gmra.mxu0 %v1621
      %v1830 = vpop.f32.mrf.mxu0
      %v1831 = vadd.f32 0.0, %v1830
      %v1832 = vpop.f32.mrf.mxu0
      %1833 = vmatprep.mubr.f32.mxu0 0.0
      %1834 = vmatmul.mubr.f32.gmra.mxu0 %v1624
      %v1835 = vpop.f32.mrf.mxu0
      %v1836 = vadd.f32 0.0, %v1835
      %v1837 = vpop.f32.mrf.mxu0
      %1838 = vmatprep.mubr.f32.mxu0 0.0
      %1839 = vmatmul.mubr.f32.gmra.mxu0 %v1627
      %v1840 = vpop.f32.mrf.mxu0
      %v1841 = vadd.f32 0.0, %v1840
      %v1842 = vpop.f32.mrf.mxu0
      %1843 = vmatprep.mubr.f32.mxu0 0.0
      %1844 = vmatmul.mubr.f32.gmra.mxu0 %v1630
      %v1845 = vpop.f32.mrf.mxu0
      %v1846 = vadd.f32 0.0, %v1845
      %v1847 = vpop.f32.mrf.mxu0
      %1848 = vmatprep.mubr.f32.mxu0 0.0
      %1849 = vmatmul.mubr.f32.gmra.mxu0 %v1633
      %v1850 = vpop.f32.mrf.mxu0
      %v1851 = vadd.f32 0.0, %v1850
      %v1852 = vpop.f32.mrf.mxu0
      %1853 = vmatprep.mubr.f32.mxu0 0.0
      %1854 = vmatmul.mubr.f32.gmra.mxu0 %v1636
      %v1855 = vpop.f32.mrf.mxu0
      %v1856 = vadd.f32 0.0, %v1855
      %v1857 = vpop.f32.mrf.mxu0
      %1858 = vmatprep.mubr.f32.mxu0 0.0
      %1859 = vmatmul.mubr.f32.gmra.mxu0 %v1639
      %v1860 = vpop.f32.mrf.mxu0
      %v1861 = vadd.f32 0.0, %v1860
      %v1862 = vpop.f32.mrf.mxu0
      %1863 = vmatprep.mubr.f32.mxu0 0.0
      %1864 = vmatmul.mubr.f32.gmra.mxu0 %v1642
      %v1865 = vpop.f32.mrf.mxu0
      %v1866 = vadd.f32 0.0, %v1865
      %v1867 = vpop.f32.mrf.mxu0
      %1868 = vmatprep.mubr.f32.mxu0 0.0
      %1869 = vmatmul.mubr.f32.gmra.mxu0 %v1645
      %v1870 = vpop.f32.mrf.mxu0
      %v1871 = vadd.f32 0.0, %v1870
      %v1872 = vpop.f32.mrf.mxu0
      %1873 = vmatprep.mubr.f32.mxu0 0.0
      %1874 = vmatmul.mubr.f32.gmra.mxu0 %v1648
      %v1875 = vpop.f32.mrf.mxu0
      %v1876 = vadd.f32 0.0, %v1875
      %v1877 = vpop.f32.mrf.mxu0
      %1878 = vdwg.mxu0
      %1879 = vst [vmem:[%s218] sm:$0xff] %v1721
      %1880 = vst [vmem:[%s218 + $0x8] sm:$0xff] %v1726
      %1881 = vst [vmem:[%s218 + $0x10] sm:$0xff] %v1731
      %1882 = vst [vmem:[%s218 + $0x18] sm:$0xff] %v1736
      %1883 = vst [vmem:[%s218 + $0x20] sm:$0xff] %v1741
      %1884 = vst [vmem:[%s218 + $0x28] sm:$0xff] %v1746
      %1885 = vst [vmem:[%s218 + $0x30] sm:$0xff] %v1751
      %1886 = vst [vmem:[%s218 + $0x38] sm:$0xff] %v1756
      %1887 = vst [vmem:[%s218 + $0x40] sm:$0xff] %v1761
      %1888 = vst [vmem:[%s218 + $0x48] sm:$0xff] %v1766
      %1889 = vst [vmem:[%s218 + $0x50] sm:$0xff] %v1771
      %1890 = vst [vmem:[%s218 + $0x58] sm:$0xff] %v1776
      %1891 = vst [vmem:[%s218 + $0x60] sm:$0xff] %v1781
      %1892 = vst [vmem:[%s218 + $0x68] sm:$0xff] %v1786
      %1893 = vst [vmem:[%s218 + $0x70] sm:$0xff] %v1791
      %1894 = vst [vmem:[%s218 + $0x78] sm:$0xff] %v1796
      %1895 = vst [vmem:[%s218 + $0x80] sm:$0xff] %v1801
      %1896 = vst [vmem:[%s218 + $0x88] sm:$0xff] %v1806
      %1897 = vst [vmem:[%s218 + $0x90] sm:$0xff] %v1811
      %1898 = vst [vmem:[%s218 + $0x98] sm:$0xff] %v1816
      %1899 = vst [vmem:[%s218 + $0xa0] sm:$0xff] %v1821
      %1900 = vst [vmem:[%s218 + $0xa8] sm:$0xff] %v1826
      %1901 = vst [vmem:[%s218 + $0xb0] sm:$0xff] %v1831
      %1902 = vst [vmem:[%s218 + $0xb8] sm:$0xff] %v1836
      %1903 = vst [vmem:[%s218 + $0xc0] sm:$0xff] %v1841
      %1904 = vst [vmem:[%s218 + $0xc8] sm:$0xff] %v1846
      %1905 = vst [vmem:[%s218 + $0xd0] sm:$0xff] %v1851
      %1906 = vst [vmem:[%s218 + $0xd8] sm:$0xff] %v1856
      %1907 = vst [vmem:[%s218 + $0xe0] sm:$0xff] %v1861
      %1908 = vst [vmem:[%s218 + $0xe8] sm:$0xff] %v1866
      %1909 = vst [vmem:[%s218 + $0xf0] sm:$0xff] %v1871
      %1910 = vst [vmem:[%s218 + $0xf8] sm:$0xff] %v1876
      %v1911 = vadd.f32 %v1721, %v1726
      %v1912 = vadd.f32 %v1911, %v1731
      %v1913 = vadd.f32 %v1912, %v1736
      %v1914 = vadd.f32 %v1913, %v1741
      %v1915 = vadd.f32 %v1914, %v1746
      %v1916 = vadd.f32 %v1915, %v1751
      %v1917 = vadd.f32 %v1916, %v1756
      %v1918 = vadd.f32 %v1917, %v1761
      %v1919 = vadd.f32 %v1918, %v1766
      %v1920 = vadd.f32 %v1919, %v1771
      %v1921 = vadd.f32 %v1920, %v1776
      %v1922 = vadd.f32 %v1921, %v1781
      %v1923 = vadd.f32 %v1922, %v1786
      %v1924 = vadd.f32 %v1923, %v1791
      %v1925 = vadd.f32 %v1924, %v1796
      %v1926 = vadd.f32 %v1925, %v1801
      %v1927 = vadd.f32 %v1926, %v1806
      %v1928 = vadd.f32 %v1927, %v1811
      %v1929 = vadd.f32 %v1928, %v1816
      %v1930 = vadd.f32 %v1929, %v1821
      %v1931 = vadd.f32 %v1930, %v1826
      %v1932 = vadd.f32 %v1931, %v1831
      %v1933 = vadd.f32 %v1932, %v1836
      %v1934 = vadd.f32 %v1933, %v1841
      %v1935 = vadd.f32 %v1934, %v1846
      %v1936 = vadd.f32 %v1935, %v1851
      %v1937 = vadd.f32 %v1936, %v1856
      %v1938 = vadd.f32 %v1937, %v1861
      %v1939 = vadd.f32 %v1938, %v1866
      %v1940 = vadd.f32 %v1939, %v1871
      %v1941 = vadd.f32 %v1940, %v1876
      %v1942 = vrot.slane %v1941, 4
      %v1943 = vadd.f32 %v1941, %v1942
      %v1944 = vrot.slane %v1943, 2
      %v1945 = vadd.f32 %v1943, %v1944
      %v1946 = vrot.slane %v1945, 1
      %v1947 = vadd.f32 %v1945, %v1946
      %v1948 = vmul.f32 %v1721, %v1721
      %v1949 = vmul.f32 %v1726, %v1726
      %v1950 = vmul.f32 %v1731, %v1731
      %v1951 = vmul.f32 %v1736, %v1736
      %v1952 = vmul.f32 %v1741, %v1741
      %v1953 = vmul.f32 %v1746, %v1746
      %v1954 = vmul.f32 %v1751, %v1751
      %v1955 = vmul.f32 %v1756, %v1756
      %v1956 = vmul.f32 %v1761, %v1761
      %v1957 = vmul.f32 %v1766, %v1766
      %v1958 = vmul.f32 %v1771, %v1771
      %v1959 = vmul.f32 %v1776, %v1776
      %v1960 = vmul.f32 %v1781, %v1781
      %v1961 = vmul.f32 %v1786, %v1786
      %v1962 = vmul.f32 %v1791, %v1791
      %v1963 = vmul.f32 %v1796, %v1796
      %v1964 = vmul.f32 %v1801, %v1801
      %v1965 = vmul.f32 %v1806, %v1806
      %v1966 = vmul.f32 %v1811, %v1811
      %v1967 = vmul.f32 %v1816, %v1816
      %v1968 = vmul.f32 %v1821, %v1821
      %v1969 = vmul.f32 %v1826, %v1826
      %v1970 = vmul.f32 %v1831, %v1831
      %v1971 = vmul.f32 %v1836, %v1836
      %v1972 = vmul.f32 %v1841, %v1841
      %v1973 = vmul.f32 %v1846, %v1846
      %v1974 = vmul.f32 %v1851, %v1851
      %v1975 = vmul.f32 %v1856, %v1856
      %v1976 = vmul.f32 %v1861, %v1861
      %v1977 = vmul.f32 %v1866, %v1866
      %v1978 = vmul.f32 %v1871, %v1871
      %v1979 = vmul.f32 %v1876, %v1876
      %v1980 = vadd.f32 %v1948, %v1949
      %v1981 = vadd.f32 %v1980, %v1950
      %v1982 = vadd.f32 %v1981, %v1951
      %v1983 = vadd.f32 %v1982, %v1952
      %v1984 = vadd.f32 %v1983, %v1953
      %v1985 = vadd.f32 %v1984, %v1954
      %v1986 = vadd.f32 %v1985, %v1955
      %v1987 = vadd.f32 %v1986, %v1956
      %v1988 = vadd.f32 %v1987, %v1957
      %v1989 = vadd.f32 %v1988, %v1958
      %v1990 = vadd.f32 %v1989, %v1959
      %v1991 = vadd.f32 %v1990, %v1960
      %v1992 = vadd.f32 %v1991, %v1961
      %v1993 = vadd.f32 %v1992, %v1962
      %v1994 = vadd.f32 %v1993, %v1963
      %v1995 = vadd.f32 %v1994, %v1964
      %v1996 = vadd.f32 %v1995, %v1965
      %v1997 = vadd.f32 %v1996, %v1966
      %v1998 = vadd.f32 %v1997, %v1967
      %v1999 = vadd.f32 %v1998, %v1968
      %v2000 = vadd.f32 %v1999, %v1969
      %v2001 = vadd.f32 %v2000, %v1970
      %v2002 = vadd.f32 %v2001, %v1971
      %v2003 = vadd.f32 %v2002, %v1972
      %v2004 = vadd.f32 %v2003, %v1973
      %v2005 = vadd.f32 %v2004, %v1974
      %v2006 = vadd.f32 %v2005, %v1975
      %v2007 = vadd.f32 %v2006, %v1976
      %v2008 = vadd.f32 %v2007, %v1977
      %v2009 = vadd.f32 %v2008, %v1978
      %v2010 = vadd.f32 %v2009, %v1979
      %v2011 = vrot.slane %v2010, 4
      %v2012 = vadd.f32 %v2010, %v2011
      %v2013 = vrot.slane %v2012, 2
      %v2014 = vadd.f32 %v2012, %v2013
      %v2015 = vrot.slane %v2014, 1
      %v2016 = vadd.f32 %v2014, %v2015
      %vm2017 = vcmask 1040384
      %v2018 = vsel %vm2017, %v1947, %v2016
      %2019 = vst [vmem:[%s225] sm:$0x3] %v2018
      %p2020 = scmp.lt.s32.totalorder %s19, 1
      %s2021 = scalar_select %p2020, %s19, 1
      %p2022 = scmp.lt.s32.totalorder %s20, 0
      %s2023 = scalar_select %p2022, %s20, 0
      %s2024 = smul.addr %s2023, 32
      %s2025 = smul.addr %s2021, 32
      %s2026 = sadd.s32 %s2024, %s2025
      %s2027 = smul.addr %s2026, 8
      %s2028 = scalar_lea.vmem %s2, %s2027
      %p2029 = scmp.lt.s32.totalorder %s19, 1
      %s2030 = scalar_select %p2029, %s19, 1
      %p2031 = scmp.lt.s32.totalorder %s20, 0
      %s2032 = scalar_select %p2031, %s20, 0
      %s2033 = sadd.s32 %s2032, %s2030
      %s2034 = smul.addr %s2033, 2
      %s2035 = scalar_lea.vmem %s3, %s2034
      // Predicated region
      $region29: #{process_de.2} parent=27 // pred_check
        %p2036 = pneg %p96
      $region30: #{process_de.2} parent=27 // pred_check_branch
        %2038 = sbr.rel (%p2036) target = $region32
      $region31: #{process_de.2} parent=27 // pred_region
        _
      $region32: #{process_de.2} parent=27 // pred_fallthru
        _
      // Predicated region
      $region33: #{process_de.2} parent=27 // pred_check
        %p2039 = pneg %p124
      $region34: #{process_de.2} parent=27 // pred_check_branch
        %2041 = sbr.rel (%p2039) target = $region36
      $region35: #{process_de.2} parent=27 // pred_region
        _
      $region36: #{process_de.2} parent=27 // pred_fallthru
        _
    $region28: #{process_de.2} parent=5 // pred_fallthru
      _
    %p2042 = scmp.le.s32.totalorder 2, %s10
    // Predicated region
    $region37: #{process_de.2} parent=5 // pred_check
      %p2043 = pneg %p2042
    $region38: #{process_de.2} parent=5 // pred_check_branch
      %2045 = sbr.rel (%p2043) target = $region40
    $region39: #{process_de.2} parent=5 // pred_region
      %s2046 = ssub.s32 %s10, 2
      // Predicated region
      $region41: #{process_de.2} parent=39 // pred_check
        %p2047 = pneg %p102
      $region42: #{process_de.2} parent=39 // pred_check_branch
        %2049 = sbr.rel (%p2047) target = $region44
      $region43: #{process_de.2} parent=39 // pred_region
        %p2050 = scmp.lt.s32.totalorder %s21, 1
        %s2051 = scalar_select %p2050, %s21, 1
        %p2052 = scmp.lt.s32.totalorder %s22, 0
        %s2053 = scalar_select %p2052, %s22, 0
        %s2054 = smul.addr %s2053, 32
        %s2055 = smul.addr %s2051, 32
        %s2056 = sadd.s32 %s2054, %s2055
        %s2057 = smul.addr %s2056, 8
        %s2058 = scalar_lea.vmem %s2, %s2057
      $region44: #{process_de.2} parent=39 // pred_fallthru
        _
      // Predicated region
      $region45: #{process_de.2} parent=39 // pred_check
        %p2059 = pneg %p130
      $region46: #{process_de.2} parent=39 // pred_check_branch
        %2061 = sbr.rel (%p2059) target = $region48
      $region47: #{process_de.2} parent=39 // pred_region
        %p2062 = scmp.lt.s32.totalorder %s21, 1
        %s2063 = scalar_select %p2062, %s21, 1
        %p2064 = scmp.lt.s32.totalorder %s22, 0
        %s2065 = scalar_select %p2064, %s22, 0
        %s2066 = sadd.s32 %s2065, %s2063
        %s2067 = smul.addr %s2066, 2
        %s2068 = scalar_lea.vmem %s3, %s2067
      $region48: #{process_de.2} parent=39 // pred_fallthru
        _
    $region40: #{process_de.2} parent=5 // pred_fallthru
      _
  $region6: #{process_de.2} parent=0 // loop_footer
    %s14 = sadd.s32 1, %s10
  $region7: #{process_de.2} parent=0 // loop_footer_branch
    %9 = sbr.rel target = $region3
  $region8: #{process_de.2} parent=0 // loop_exit
    _

</llo_original>
